<compile_context>
chip_gen: v7x
topology: tpu7x:2x2x1
jax: 0.10.0
libtpu: 0.0.40
codegen_flags: <defaults>
</compile_context>

<pallas_src>
import math

import numpy as np
import jax
import jax.numpy as jnp
from jax.experimental import pallas as pl
from jax.experimental.pallas import tpu as pltpu


def _round_up(x: int, m: int) -> int:
    return ((int(x) + m - 1) // m) * m


# ----------------------------------------------------------------------------
# F.interpolate (1D, 'nearest' / 'linear' align_corners=False) as a (K, H_out)
# matrix so it can be folded into the output Linear offline.
# ----------------------------------------------------------------------------
def _interp_matrix(K: int, H_out: int, mode: str) -> np.ndarray:
    M = np.zeros((K, H_out), dtype=np.float32)
    scale = K / H_out
    if mode == "nearest":
        for i in range(H_out):
            src = min(int(np.floor(i * scale)), K - 1)
            M[src, i] = 1.0
    elif mode == "linear":
        for i in range(H_out):
            src = scale * (i + 0.5) - 0.5
            src = max(src, 0.0)
            x0 = min(int(np.floor(src)), K - 1)
            x1 = min(x0 + 1, K - 1)
            lam = src - x0
            M[x0, i] += 1.0 - lam
            M[x1, i] += lam
    else:
        raise ValueError("interpolation mode must be 'nearest' or 'linear'")
    return M


def _linear_params(key, fan_in: int, fan_out: int):
    """PyTorch nn.Linear default init; returns numpy (W[in,out], b[out])."""
    kw, kb = jax.random.split(key)
    bound = 1.0 / math.sqrt(fan_in)
    W = jax.random.uniform(kw, (fan_in, fan_out), jnp.float32, -bound, bound)
    b = jax.random.uniform(kb, (fan_out,), jnp.float32, -bound, bound)
    return np.asarray(W), np.asarray(b)


# ----------------------------------------------------------------------------
# Fused kernel: every block + residual update + forecast accumulation.
# Refs: insample tile (C, TB, L), [per-block weights ...], forecast out.
# ----------------------------------------------------------------------------
def _make_fused_kernel(plan, C, L, H_pad, TB, compute_dtype):
    n_w = sum(2 + 2 * blk["n_hidden"] + 4 for blk in plan)

    def kernel(*refs):
        y_ref = refs[0]
        wrefs = refs[1:1 + n_w]
        out_ref = refs[1 + n_w]

        # Only channel 0 is ever updated by the backcast; channels 1..C-1 are
        # read-only for the whole forward pass.
        res0 = y_ref[0]                                   # (TB, L) float32
        rest = [y_ref[c] for c in range(1, C)]            # read-only channels
        fc = jnp.zeros((TB, H_pad), jnp.float32)

        def pool_lane(x2d, k):
            # MaxPool1d(kernel=k, stride=k, ceil_mode=True), lane-dense.
            # The window max lands on lane p*k; the other lanes hold junk
            # that hits the zero rows of the expanded first-layer weight.
            # Computed as k-1 shifted maxima on values (no VMEM scratch,
            # no per-block scratch store / unaligned VMEM reads).
            if k == 1:
                return x2d
            ext = jnp.concatenate(
                [x2d, jnp.full((TB, k - 1), -jnp.inf, jnp.float32)], axis=-1)
            wm = x2d
            for j in range(1, k):
                wm = jnp.maximum(wm, ext[:, j:j + L])
            return wm

        # Pooled + cast read-only channels, cached per pooling kernel size k
        # (trace-time cache: reused by every block that shares the same k).
        rest_cache = {}

        def pooled_rest(k):
            if k not in rest_cache:
                rest_cache[k] = [pool_lane(r, k).astype(compute_dtype)
                                 for r in rest]
            return rest_cache[k]

        wi = 0
        for blk in plan:
            k = blk["k"]

            # ---- pooling: channel 0 changes each block, others are cached.
            x0 = pool_lane(res0, k).astype(compute_dtype)
            if C > 1:
                x_in = jnp.concatenate([x0] + pooled_rest(k), axis=-1)
            else:
                x_in = x0                                  # (TB, C*L)

            # ---- first Linear: ONE MXU dot with K = C*L (pool subsample
            # folded into the zero-expanded weight rows).  No activation
            # after the first Linear (matches the PyTorch layer stack).
            w0_ref, b0_ref = wrefs[wi], wrefs[wi + 1]
            wi += 2
            h = jnp.dot(x_in, w0_ref[...],
                        preferred_element_type=jnp.float32) + b0_ref[...]

            # ---- hidden Linear -> ReLU -> Dropout(p=0) == identity.
            for _ in range(blk["n_hidden"]):
                w_ref, b_ref = wrefs[wi], wrefs[wi + 1]
                wi += 2
                h = jnp.dot(h.astype(compute_dtype), w_ref[...],
                            preferred_element_type=jnp.float32) + b_ref[...]
                h = jnp.maximum(h, 0.0)

            # ---- output Linear split into backcast + (knots @ interp) parts.
            hc = h.astype(compute_dtype)
            wb_ref, bb_ref, wf_ref, bf_ref = wrefs[wi:wi + 4]
            wi += 4
            backcast = jnp.dot(hc, wb_ref[...],
                               preferred_element_type=jnp.float32) + bb_ref[...]
            fc = fc + jnp.dot(hc, wf_ref[...],
                              preferred_element_type=jnp.float32) + bf_ref[...]

            # ---- residual update touches channel 0 only (no tensor rebuild).
            res0 = res0 - backcast

        out_ref[...] = fc

    return kernel


# ----------------------------------------------------------------------------
# Model wrapper: parameter construction (master f32 + fused/folded kernel
# params) and the fused forward pass.
# ----------------------------------------------------------------------------
class NHITSPallas:
    def __init__(self, key, *, N_cols, output_horizon, input_horizon, n_blocks,
                 mlp_units_list, n_pool_kernel_size, n_freq_downsample,
                 pooling_mode="maxpool1d", interpolation_mode="linear",
                 dropout_ratio=0.0, activation="relu",
                 compute_dtype=jnp.bfloat16):
        # TODO(synk): only maxpool1d + relu (+ nearest/linear interpolation,
        # Dropout as identity) of the reference config are implemented.
        if pooling_mode != "maxpool1d":
            raise NotImplementedError("only pooling_mode='maxpool1d' supported")
        if activation != "relu":
            raise NotImplementedError("only activation='relu' supported")

        self.N_cols = C = int(N_cols)
        self.input_horizon = L = int(input_horizon)
        self.output_horizon = H = int(output_horizon)
        self.compute_dtype = compute_dtype
        self.H_pad = _round_up(H, 128)

        self.master_blocks = []     # original (unfused) f32 parameters
        self.plan = []              # static per-block structure for the kernel
        flat = []                   # fused / folded kernel parameters

        for i in range(len(n_blocks)):
            for _ in range(n_blocks[i]):
                k = int(n_pool_kernel_size[i])
                P = -(-L // k)                          # ceil(L / k)
                F = P * C
                K = max(H // int(n_freq_downsample[i]), 1)
                n_theta = L + K
                dims = [F] + list(mlp_units_list) + [n_theta]
                params = []
                for j in range(len(dims) - 1):
                    key, sub = jax.random.split(key)
                    params.append(_linear_params(sub, dims[j], dims[j + 1]))
                interp = _interp_matrix(K, H, interpolation_mode)
                self.master_blocks.append({"k": k, "params": params,
                                           "interp": interp})

                units = list(mlp_units_list)
                padded = [_round_up(u, 128) for u in units]

                # First Linear: fold the max-pool lane subsample into one
                # zero-expanded (C*L, hp0) weight: row c*L + p*k holds W0 row
                # (c*P + p); all other rows are zero.  Single K=C*L MXU dot.
                W0, b0 = params[0]
                w0e = np.zeros((C * L, padded[0]), np.float32)
                for c in range(C):
                    for p in range(P):
                        w0e[c * L + p * k, :units[0]] = W0[c * P + p]
                b0e = np.zeros((1, padded[0]), np.float32)
                b0e[0, :units[0]] = b0
                flat += [jnp.asarray(w0e, compute_dtype),
                         jnp.asarray(b0e, jnp.float32)]

                # Hidden Linears, zero-padded to lane-aligned widths (exact).
                for li in range(1, len(params) - 1):
                    W, b = params[li]
                    Wp = np.zeros((padded[li - 1], padded[li]), np.float32)
                    Wp[:units[li - 1], :units[li]] = W
                    bp = np.zeros((1, padded[li]), np.float32)
                    bp[0, :units[li]] = b
                    flat += [jnp.asarray(Wp, compute_dtype),
                             jnp.asarray(bp, jnp.float32)]

                # Output Linear: split into backcast part and forecast part
                # with F.interpolate folded in, lane-padded to 128.
                Wout, bout = params[-1]
                Wb = np.zeros((padded[-1], L), np.float32)
                Wb[:units[-1], :] = Wout[:, :L]
                bb = np.asarray(bout[:L], np.float32).reshape(1, L)
                Wf = Wout[:, L:] @ interp
                bfv = bout[L:] @ interp
                Wfp = np.zeros((padded[-1], self.H_pad), np.float32)
                Wfp[:units[-1], :H] = Wf
                bfp = np.zeros((1, self.H_pad), np.float32)
                bfp[0, :H] = bfv
                flat += [jnp.asarray(Wb, compute_dtype),
                         jnp.asarray(bb, jnp.float32),
                         jnp.asarray(Wfp, compute_dtype),
                         jnp.asarray(bfp, jnp.float32)]

                self.plan.append({"k": k, "n_hidden": len(params) - 2})

        self.flat_params = flat
        self._w_bytes = sum(int(np.prod(a.shape)) * a.dtype.itemsize
                            for a in flat)
        self._forward_jit = jax.jit(self._forward)

    # ------------------------------------------------------------------
    def _forward(self, x, flat_params):
        B, C, L = x.shape

        # Batch tiling: >=8 sublane rows; weights are VMEM-resident so large
        # tiles are cheap (cap 512).  When B > 8 force >= 2 grid steps so the
        # "parallel" batch axis can shard across the two v7x TensorCores.
        TB_cap = 512
        n_tiles = 2 if B > 8 else 1
        n_tiles = max(n_tiles, -(-B // TB_cap))
        TB = _round_up(-(-B // n_tiles), 8)
        B_pad = TB * n_tiles

        xt = jnp.transpose(x, (1, 0, 2))        # (C, B, L): L lane-dense
        if B_pad != B:
            xt = jnp.pad(xt, ((0, 0), (0, B_pad - B), (0, 0)))

        kernel = _make_fused_kernel(self.plan, C, L, self.H_pad, TB,
                                    self.compute_dtype)
        n_w = len(flat_params)

        # Generation-aware VMEM budget: physical capacity minus headroom for
        # compiler-internal scratch; request covers (possibly double-buffered)
        # weights + pipelined input/output tiles + slack.
        try:
            cap = int(pltpu.get_tpu_info().vmem_capacity_bytes)
        except Exception:
            cap = 64 * 2**20                    # conservative (v7x-sized)
        cap = cap - 12 * 2**20                  # headroom
        need = (2 * self._w_bytes
                + 2 * (C * TB * L * 4)
                + 2 * (TB * self.H_pad * 4)
                + 8 * 2**20)
        vmem_limit = int(min(cap, max(32 * 2**20, need)))

        out = pl.pallas_call(
            kernel,
            out_shape=jax.ShapeDtypeStruct((B_pad, self.H_pad), jnp.float32),
            grid_spec=pltpu.PrefetchScalarGridSpec(
                num_scalar_prefetch=0,
                grid=(n_tiles,),
                in_specs=(
                    [pl.BlockSpec((C, TB, L), lambda b: (0, b, 0))]
                    # Weights: whole-array VMEM residents (their block never
                    # changes across the batch grid).
                    # TODO(synk): for very large configs on v7x (64 MiB VMEM)
                    # stream per-block weights over a trailing "arbitrary"
                    # grid axis instead of keeping every block resident.
                    + [pl.BlockSpec(memory_space=pltpu.MemorySpace.VMEM)] * n_w
                ),
                out_specs=pl.BlockSpec((TB, self.H_pad), lambda b: (b, 0)),
            ),
            compiler_params=pltpu.CompilerParams(
                dimension_semantics=("parallel",),
                vmem_limit_bytes=vmem_limit,
            ),
        )(xt, *flat_params)

        return out[:B, :self.output_horizon].reshape(B, 1, self.output_horizon)

    def __call__(self, insample_y):
        return self._forward_jit(jnp.asarray(insample_y, jnp.float32),
                                 self.flat_params)


# ----------------------------------------------------------------------------
# Pure-JAX reference with the original (unfused) math and f32 master weights.
# ----------------------------------------------------------------------------
def _reference_forward(model: NHITSPallas, insample_y) -> jnp.ndarray:
    hi = jax.lax.Precision.HIGHEST
    x = jnp.asarray(insample_y, jnp.float32)
    B, C, L = x.shape
    residuals = x
    forecast = jnp.zeros((B, 1, model.output_horizon), jnp.float32)
    for blk in model.master_blocks:
        k = blk["k"]
        P = -(-L // k)
        pad = P * k - L
        xr = residuals
        if pad:
            xr = jnp.pad(xr, ((0, 0), (0, 0), (0, pad)),
                         constant_values=-jnp.inf)
        pooled = jnp.max(xr.reshape(B, C, P, k), axis=-1).reshape(B, C * P)
        params = blk["params"]
        W0, b0 = params[0]
        h = jnp.dot(pooled, jnp.asarray(W0), precision=hi) + jnp.asarray(b0)
        for W, b in params[1:-1]:
            h = jnp.maximum(
                jnp.dot(h, jnp.asarray(W), precision=hi) + jnp.asarray(b), 0.0)
        Wout, bout = params[-1]
        theta = jnp.dot(h, jnp.asarray(Wout), precision=hi) + jnp.asarray(bout)
        backcast = theta[:, :L]
        knots = theta[:, L:]
        fc = jnp.dot(knots, jnp.asarray(blk["interp"]), precision=hi)
        residuals = residuals.at[:, 0, :].add(-backcast)
        forecast = forecast + fc[:, None, :]
    return forecast


if __name__ == "__main__":
    key = jax.random.PRNGKey(0)
    kparams, kx = jax.random.split(key)

    B, C, L, H = 2, 4, 16, 8
    cfg = dict(
        N_cols=C, output_horizon=H, input_horizon=L,
        n_blocks=[1, 1, 1],
        mlp_units_list=[32, 32],
        n_pool_kernel_size=[2, 4, 3],      # k=3 exercises ragged ceil-mode pool
        n_freq_downsample=[4, 2, 1],
        pooling_mode="maxpool1d",
        interpolation_mode="linear",
        dropout_ratio=0.0,
        activation="relu",
    )
    insample_y = jax.random.normal(kx, (B, C, L), jnp.float32)

    # f32 weights: tight structural check of the fused/folded kernel.
    model_f32 = NHITSPallas(kparams, compute_dtype=jnp.float32, **cfg)
    out_f32 = jax.block_until_ready(model_f32(insample_y))
    assert out_f32.shape == (B, 1, H)
    ref = jax.block_until_ready(_reference_forward(model_f32, insample_y))
    np.testing.assert_allclose(np.asarray(out_f32), np.asarray(ref),
                               rtol=2e-2, atol=1e-2)

    # bf16 weights (production default): looser tolerance vs. the f32 ref.
    model_bf16 = NHITSPallas(kparams, compute_dtype=jnp.bfloat16, **cfg)
    out_bf16 = jax.block_until_ready(model_bf16(insample_y))
    assert out_bf16.shape == (B, 1, H)
    np.testing.assert_allclose(np.asarray(out_bf16), np.asarray(ref),
                               rtol=1e-1, atol=1e-1)

    print("KERNEL_OK")
</pallas_src>

<mosaic_0001>
module attributes {stable_mosaic.version = 11 : i64} {
  func.func @kernel(%arg0: i32, %arg1: memref<4x8x16xf32, #tpu.memory_space<vmem>>, %arg2: memref<64x128xf32, #tpu.memory_space<vmem>>, %arg3: memref<1x128xf32, #tpu.memory_space<vmem>>, %arg4: memref<128x128xf32, #tpu.memory_space<vmem>>, %arg5: memref<1x128xf32, #tpu.memory_space<vmem>>, %arg6: memref<128x16xf32, #tpu.memory_space<vmem>>, %arg7: memref<1x16xf32, #tpu.memory_space<vmem>>, %arg8: memref<128x128xf32, #tpu.memory_space<vmem>>, %arg9: memref<1x128xf32, #tpu.memory_space<vmem>>, %arg10: memref<64x128xf32, #tpu.memory_space<vmem>>, %arg11: memref<1x128xf32, #tpu.memory_space<vmem>>, %arg12: memref<128x128xf32, #tpu.memory_space<vmem>>, %arg13: memref<1x128xf32, #tpu.memory_space<vmem>>, %arg14: memref<128x16xf32, #tpu.memory_space<vmem>>, %arg15: memref<1x16xf32, #tpu.memory_space<vmem>>, %arg16: memref<128x128xf32, #tpu.memory_space<vmem>>, %arg17: memref<1x128xf32, #tpu.memory_space<vmem>>, %arg18: memref<64x128xf32, #tpu.memory_space<vmem>>, %arg19: memref<1x128xf32, #tpu.memory_space<vmem>>, %arg20: memref<128x128xf32, #tpu.memory_space<vmem>>, %arg21: memref<1x128xf32, #tpu.memory_space<vmem>>, %arg22: memref<128x16xf32, #tpu.memory_space<vmem>>, %arg23: memref<1x16xf32, #tpu.memory_space<vmem>>, %arg24: memref<128x128xf32, #tpu.memory_space<vmem>>, %arg25: memref<1x128xf32, #tpu.memory_space<vmem>>, %arg26: memref<8x128xf32, #tpu.memory_space<vmem>>) attributes {dimension_semantics = [#tpu.dimension_semantics<parallel>], iteration_bounds = array<i64: 1>, scalar_prefetch = 0 : i64, scratch_operands = 0 : i64, tpu.core_type = #tpu.core_type<tc>, window_params = [{transform_indices = @transform_0, window_bounds = array<i64: 4, 8, 16>}, {pipeline_mode = #tpu.pipeline_mode<synchronous>, transform_indices = @transform_1, window_bounds = array<i64: 64, 128>}, {pipeline_mode = #tpu.pipeline_mode<synchronous>, transform_indices = @transform_2, window_bounds = array<i64: 1, 128>}, {pipeline_mode = #tpu.pipeline_mode<synchronous>, transform_indices = @transform_3, window_bounds = array<i64: 128, 128>}, {pipeline_mode = #tpu.pipeline_mode<synchronous>, transform_indices = @transform_4, window_bounds = array<i64: 1, 128>}, {pipeline_mode = #tpu.pipeline_mode<synchronous>, transform_indices = @transform_5, window_bounds = array<i64: 128, 16>}, {pipeline_mode = #tpu.pipeline_mode<synchronous>, transform_indices = @transform_6, window_bounds = array<i64: 1, 16>}, {pipeline_mode = #tpu.pipeline_mode<synchronous>, transform_indices = @transform_7, window_bounds = array<i64: 128, 128>}, {pipeline_mode = #tpu.pipeline_mode<synchronous>, transform_indices = @transform_8, window_bounds = array<i64: 1, 128>}, {pipeline_mode = #tpu.pipeline_mode<synchronous>, transform_indices = @transform_9, window_bounds = array<i64: 64, 128>}, {pipeline_mode = #tpu.pipeline_mode<synchronous>, transform_indices = @transform_10, window_bounds = array<i64: 1, 128>}, {pipeline_mode = #tpu.pipeline_mode<synchronous>, transform_indices = @transform_11, window_bounds = array<i64: 128, 128>}, {pipeline_mode = #tpu.pipeline_mode<synchronous>, transform_indices = @transform_12, window_bounds = array<i64: 1, 128>}, {pipeline_mode = #tpu.pipeline_mode<synchronous>, transform_indices = @transform_13, window_bounds = array<i64: 128, 16>}, {pipeline_mode = #tpu.pipeline_mode<synchronous>, transform_indices = @transform_14, window_bounds = array<i64: 1, 16>}, {pipeline_mode = #tpu.pipeline_mode<synchronous>, transform_indices = @transform_15, window_bounds = array<i64: 128, 128>}, {pipeline_mode = #tpu.pipeline_mode<synchronous>, transform_indices = @transform_16, window_bounds = array<i64: 1, 128>}, {pipeline_mode = #tpu.pipeline_mode<synchronous>, transform_indices = @transform_17, window_bounds = array<i64: 64, 128>}, {pipeline_mode = #tpu.pipeline_mode<synchronous>, transform_indices = @transform_18, window_bounds = array<i64: 1, 128>}, {pipeline_mode = #tpu.pipeline_mode<synchronous>, transform_indices = @transform_19, window_bounds = array<i64: 128, 128>}, {pipeline_mode = #tpu.pipeline_mode<synchronous>, transform_indices = @transform_20, window_bounds = array<i64: 1, 128>}, {pipeline_mode = #tpu.pipeline_mode<synchronous>, transform_indices = @transform_21, window_bounds = array<i64: 128, 16>}, {pipeline_mode = #tpu.pipeline_mode<synchronous>, transform_indices = @transform_22, window_bounds = array<i64: 1, 16>}, {pipeline_mode = #tpu.pipeline_mode<synchronous>, transform_indices = @transform_23, window_bounds = array<i64: 128, 128>}, {pipeline_mode = #tpu.pipeline_mode<synchronous>, transform_indices = @transform_24, window_bounds = array<i64: 1, 128>}, {transform_indices = @transform_25, window_bounds = array<i64: 8, 128>}]} {
    %c0 = arith.constant 0 : index
    %c0_0 = arith.constant 0 : index
    %c0_1 = arith.constant 0 : index
    %0 = vector.load %arg1[%c0, %c0_0, %c0_1] : memref<4x8x16xf32, #tpu.memory_space<vmem>>, vector<1x8x16xf32>
    %1 = vector.shape_cast %0 : vector<1x8x16xf32> to vector<8x16xf32>
    %c1 = arith.constant 1 : index
    %c0_2 = arith.constant 0 : index
    %c0_3 = arith.constant 0 : index
    %2 = vector.load %arg1[%c1, %c0_2, %c0_3] : memref<4x8x16xf32, #tpu.memory_space<vmem>>, vector<1x8x16xf32>
    %3 = vector.shape_cast %2 : vector<1x8x16xf32> to vector<8x16xf32>
    %c2 = arith.constant 2 : index
    %c0_4 = arith.constant 0 : index
    %c0_5 = arith.constant 0 : index
    %4 = vector.load %arg1[%c2, %c0_4, %c0_5] : memref<4x8x16xf32, #tpu.memory_space<vmem>>, vector<1x8x16xf32>
    %5 = vector.shape_cast %4 : vector<1x8x16xf32> to vector<8x16xf32>
    %c3 = arith.constant 3 : index
    %c0_6 = arith.constant 0 : index
    %c0_7 = arith.constant 0 : index
    %6 = vector.load %arg1[%c3, %c0_6, %c0_7] : memref<4x8x16xf32, #tpu.memory_space<vmem>>, vector<1x8x16xf32>
    %7 = vector.shape_cast %6 : vector<1x8x16xf32> to vector<8x16xf32>
    %cst = arith.constant 0.000000e+00 : f32
    %8 = vector.broadcast %cst : f32 to vector<8x128xf32>
    %cst_8 = arith.constant 0xFF800000 : f32
    %9 = vector.broadcast %cst_8 : f32 to vector<8x1xf32>
    %10 = tpu.concatenate %1, %9 in 1 : vector<8x16xf32>, vector<8x1xf32> -> vector<8x17xf32>
    %11 = vector.extract_strided_slice %10 {offsets = [0, 1], sizes = [8, 16], strides = [1, 1]} : vector<8x17xf32> to vector<8x16xf32>
    %12 = arith.maximumf %1, %11 : vector<8x16xf32>
    %cst_9 = arith.constant 0xFF800000 : f32
    %13 = vector.broadcast %cst_9 : f32 to vector<8x1xf32>
    %14 = tpu.concatenate %3, %13 in 1 : vector<8x16xf32>, vector<8x1xf32> -> vector<8x17xf32>
    %15 = vector.extract_strided_slice %14 {offsets = [0, 1], sizes = [8, 16], strides = [1, 1]} : vector<8x17xf32> to vector<8x16xf32>
    %16 = arith.maximumf %3, %15 : vector<8x16xf32>
    %cst_10 = arith.constant 0xFF800000 : f32
    %17 = vector.broadcast %cst_10 : f32 to vector<8x1xf32>
    %18 = tpu.concatenate %5, %17 in 1 : vector<8x16xf32>, vector<8x1xf32> -> vector<8x17xf32>
    %19 = vector.extract_strided_slice %18 {offsets = [0, 1], sizes = [8, 16], strides = [1, 1]} : vector<8x17xf32> to vector<8x16xf32>
    %20 = arith.maximumf %5, %19 : vector<8x16xf32>
    %cst_11 = arith.constant 0xFF800000 : f32
    %21 = vector.broadcast %cst_11 : f32 to vector<8x1xf32>
    %22 = tpu.concatenate %7, %21 in 1 : vector<8x16xf32>, vector<8x1xf32> -> vector<8x17xf32>
    %23 = vector.extract_strided_slice %22 {offsets = [0, 1], sizes = [8, 16], strides = [1, 1]} : vector<8x17xf32> to vector<8x16xf32>
    %24 = arith.maximumf %7, %23 : vector<8x16xf32>
    %25 = tpu.concatenate %12, %16, %20, %24 in 1 : vector<8x16xf32>, vector<8x16xf32>, vector<8x16xf32>, vector<8x16xf32> -> vector<8x64xf32>
    %c0_12 = arith.constant 0 : index
    %c0_13 = arith.constant 0 : index
    %26 = vector.load %arg2[%c0_12, %c0_13] : memref<64x128xf32, #tpu.memory_space<vmem>>, vector<64x128xf32>
    %cst_14 = arith.constant dense<0.000000e+00> : vector<8x128xf32>
    %27 = tpu.matmul %25, %26, %cst_14 {dimension_numbers = #tpu.dot_dimension_numbers<[1], [0], [0], [1], [0, 0, 1, 1], [], []>} : vector<8x64xf32>, vector<64x128xf32>, vector<8x128xf32> -> vector<8x128xf32>
    %c0_15 = arith.constant 0 : index
    %c0_16 = arith.constant 0 : index
    %28 = vector.load %arg3[%c0_15, %c0_16] : memref<1x128xf32, #tpu.memory_space<vmem>>, vector<1x128xf32>
    %29 = vector.broadcast %28 : vector<1x128xf32> to vector<8x128xf32>
    %30 = arith.addf %27, %29 : vector<8x128xf32>
    %c0_17 = arith.constant 0 : index
    %c0_18 = arith.constant 0 : index
    %31 = vector.load %arg4[%c0_17, %c0_18] : memref<128x128xf32, #tpu.memory_space<vmem>>, vector<128x128xf32>
    %cst_19 = arith.constant dense<0.000000e+00> : vector<8x128xf32>
    %32 = tpu.matmul %30, %31, %cst_19 {dimension_numbers = #tpu.dot_dimension_numbers<[1], [0], [0], [1], [0, 0, 1, 1], [], []>} : vector<8x128xf32>, vector<128x128xf32>, vector<8x128xf32> -> vector<8x128xf32>
    %c0_20 = arith.constant 0 : index
    %c0_21 = arith.constant 0 : index
    %33 = vector.load %arg5[%c0_20, %c0_21] : memref<1x128xf32, #tpu.memory_space<vmem>>, vector<1x128xf32>
    %34 = vector.broadcast %33 : vector<1x128xf32> to vector<8x128xf32>
    %35 = arith.addf %32, %34 : vector<8x128xf32>
    %cst_22 = arith.constant 0.000000e+00 : f32
    %36 = vector.broadcast %cst_22 : f32 to vector<8x128xf32>
    %37 = arith.maximumf %35, %36 : vector<8x128xf32>
    %c0_23 = arith.constant 0 : index
    %c0_24 = arith.constant 0 : index
    %38 = vector.load %arg6[%c0_23, %c0_24] : memref<128x16xf32, #tpu.memory_space<vmem>>, vector<128x16xf32>
    %cst_25 = arith.constant dense<0.000000e+00> : vector<8x16xf32>
    %39 = tpu.matmul %37, %38, %cst_25 {dimension_numbers = #tpu.dot_dimension_numbers<[1], [0], [0], [1], [0, 0, 1, 1], [], []>} : vector<8x128xf32>, vector<128x16xf32>, vector<8x16xf32> -> vector<8x16xf32>
    %c0_26 = arith.constant 0 : index
    %c0_27 = arith.constant 0 : index
    %40 = vector.load %arg7[%c0_26, %c0_27] : memref<1x16xf32, #tpu.memory_space<vmem>>, vector<1x16xf32>
    %41 = vector.broadcast %40 : vector<1x16xf32> to vector<8x16xf32>
    %42 = arith.addf %39, %41 : vector<8x16xf32>
    %c0_28 = arith.constant 0 : index
    %c0_29 = arith.constant 0 : index
    %43 = vector.load %arg8[%c0_28, %c0_29] : memref<128x128xf32, #tpu.memory_space<vmem>>, vector<128x128xf32>
    %cst_30 = arith.constant dense<0.000000e+00> : vector<8x128xf32>
    %44 = tpu.matmul %37, %43, %cst_30 {dimension_numbers = #tpu.dot_dimension_numbers<[1], [0], [0], [1], [0, 0, 1, 1], [], []>} : vector<8x128xf32>, vector<128x128xf32>, vector<8x128xf32> -> vector<8x128xf32>
    %45 = arith.addf %8, %44 : vector<8x128xf32>
    %c0_31 = arith.constant 0 : index
    %c0_32 = arith.constant 0 : index
    %46 = vector.load %arg9[%c0_31, %c0_32] : memref<1x128xf32, #tpu.memory_space<vmem>>, vector<1x128xf32>
    %47 = vector.broadcast %46 : vector<1x128xf32> to vector<8x128xf32>
    %48 = arith.addf %45, %47 : vector<8x128xf32>
    %49 = arith.subf %1, %42 : vector<8x16xf32>
    %cst_33 = arith.constant 0xFF800000 : f32
    %50 = vector.broadcast %cst_33 : f32 to vector<8x3xf32>
    %51 = tpu.concatenate %49, %50 in 1 : vector<8x16xf32>, vector<8x3xf32> -> vector<8x19xf32>
    %52 = vector.extract_strided_slice %51 {offsets = [0, 1], sizes = [8, 16], strides = [1, 1]} : vector<8x19xf32> to vector<8x16xf32>
    %53 = arith.maximumf %49, %52 : vector<8x16xf32>
    %54 = vector.extract_strided_slice %51 {offsets = [0, 2], sizes = [8, 16], strides = [1, 1]} : vector<8x19xf32> to vector<8x16xf32>
    %55 = arith.maximumf %53, %54 : vector<8x16xf32>
    %56 = vector.extract_strided_slice %51 {offsets = [0, 3], sizes = [8, 16], strides = [1, 1]} : vector<8x19xf32> to vector<8x16xf32>
    %57 = arith.maximumf %55, %56 : vector<8x16xf32>
    %cst_34 = arith.constant 0xFF800000 : f32
    %58 = vector.broadcast %cst_34 : f32 to vector<8x3xf32>
    %59 = tpu.concatenate %3, %58 in 1 : vector<8x16xf32>, vector<8x3xf32> -> vector<8x19xf32>
    %60 = vector.extract_strided_slice %59 {offsets = [0, 1], sizes = [8, 16], strides = [1, 1]} : vector<8x19xf32> to vector<8x16xf32>
    %61 = arith.maximumf %3, %60 : vector<8x16xf32>
    %62 = vector.extract_strided_slice %59 {offsets = [0, 2], sizes = [8, 16], strides = [1, 1]} : vector<8x19xf32> to vector<8x16xf32>
    %63 = arith.maximumf %61, %62 : vector<8x16xf32>
    %64 = vector.extract_strided_slice %59 {offsets = [0, 3], sizes = [8, 16], strides = [1, 1]} : vector<8x19xf32> to vector<8x16xf32>
    %65 = arith.maximumf %63, %64 : vector<8x16xf32>
    %cst_35 = arith.constant 0xFF800000 : f32
    %66 = vector.broadcast %cst_35 : f32 to vector<8x3xf32>
    %67 = tpu.concatenate %5, %66 in 1 : vector<8x16xf32>, vector<8x3xf32> -> vector<8x19xf32>
    %68 = vector.extract_strided_slice %67 {offsets = [0, 1], sizes = [8, 16], strides = [1, 1]} : vector<8x19xf32> to vector<8x16xf32>
    %69 = arith.maximumf %5, %68 : vector<8x16xf32>
    %70 = vector.extract_strided_slice %67 {offsets = [0, 2], sizes = [8, 16], strides = [1, 1]} : vector<8x19xf32> to vector<8x16xf32>
    %71 = arith.maximumf %69, %70 : vector<8x16xf32>
    %72 = vector.extract_strided_slice %67 {offsets = [0, 3], sizes = [8, 16], strides = [1, 1]} : vector<8x19xf32> to vector<8x16xf32>
    %73 = arith.maximumf %71, %72 : vector<8x16xf32>
    %cst_36 = arith.constant 0xFF800000 : f32
    %74 = vector.broadcast %cst_36 : f32 to vector<8x3xf32>
    %75 = tpu.concatenate %7, %74 in 1 : vector<8x16xf32>, vector<8x3xf32> -> vector<8x19xf32>
    %76 = vector.extract_strided_slice %75 {offsets = [0, 1], sizes = [8, 16], strides = [1, 1]} : vector<8x19xf32> to vector<8x16xf32>
    %77 = arith.maximumf %7, %76 : vector<8x16xf32>
    %78 = vector.extract_strided_slice %75 {offsets = [0, 2], sizes = [8, 16], strides = [1, 1]} : vector<8x19xf32> to vector<8x16xf32>
    %79 = arith.maximumf %77, %78 : vector<8x16xf32>
    %80 = vector.extract_strided_slice %75 {offsets = [0, 3], sizes = [8, 16], strides = [1, 1]} : vector<8x19xf32> to vector<8x16xf32>
    %81 = arith.maximumf %79, %80 : vector<8x16xf32>
    %82 = tpu.concatenate %57, %65, %73, %81 in 1 : vector<8x16xf32>, vector<8x16xf32>, vector<8x16xf32>, vector<8x16xf32> -> vector<8x64xf32>
    %c0_37 = arith.constant 0 : index
    %c0_38 = arith.constant 0 : index
    %83 = vector.load %arg10[%c0_37, %c0_38] : memref<64x128xf32, #tpu.memory_space<vmem>>, vector<64x128xf32>
    %cst_39 = arith.constant dense<0.000000e+00> : vector<8x128xf32>
    %84 = tpu.matmul %82, %83, %cst_39 {dimension_numbers = #tpu.dot_dimension_numbers<[1], [0], [0], [1], [0, 0, 1, 1], [], []>} : vector<8x64xf32>, vector<64x128xf32>, vector<8x128xf32> -> vector<8x128xf32>
    %c0_40 = arith.constant 0 : index
    %c0_41 = arith.constant 0 : index
    %85 = vector.load %arg11[%c0_40, %c0_41] : memref<1x128xf32, #tpu.memory_space<vmem>>, vector<1x128xf32>
    %86 = vector.broadcast %85 : vector<1x128xf32> to vector<8x128xf32>
    %87 = arith.addf %84, %86 : vector<8x128xf32>
    %c0_42 = arith.constant 0 : index
    %c0_43 = arith.constant 0 : index
    %88 = vector.load %arg12[%c0_42, %c0_43] : memref<128x128xf32, #tpu.memory_space<vmem>>, vector<128x128xf32>
    %cst_44 = arith.constant dense<0.000000e+00> : vector<8x128xf32>
    %89 = tpu.matmul %87, %88, %cst_44 {dimension_numbers = #tpu.dot_dimension_numbers<[1], [0], [0], [1], [0, 0, 1, 1], [], []>} : vector<8x128xf32>, vector<128x128xf32>, vector<8x128xf32> -> vector<8x128xf32>
    %c0_45 = arith.constant 0 : index
    %c0_46 = arith.constant 0 : index
    %90 = vector.load %arg13[%c0_45, %c0_46] : memref<1x128xf32, #tpu.memory_space<vmem>>, vector<1x128xf32>
    %91 = vector.broadcast %90 : vector<1x128xf32> to vector<8x128xf32>
    %92 = arith.addf %89, %91 : vector<8x128xf32>
    %cst_47 = arith.constant 0.000000e+00 : f32
    %93 = vector.broadcast %cst_47 : f32 to vector<8x128xf32>
    %94 = arith.maximumf %92, %93 : vector<8x128xf32>
    %c0_48 = arith.constant 0 : index
    %c0_49 = arith.constant 0 : index
    %95 = vector.load %arg14[%c0_48, %c0_49] : memref<128x16xf32, #tpu.memory_space<vmem>>, vector<128x16xf32>
    %cst_50 = arith.constant dense<0.000000e+00> : vector<8x16xf32>
    %96 = tpu.matmul %94, %95, %cst_50 {dimension_numbers = #tpu.dot_dimension_numbers<[1], [0], [0], [1], [0, 0, 1, 1], [], []>} : vector<8x128xf32>, vector<128x16xf32>, vector<8x16xf32> -> vector<8x16xf32>
    %c0_51 = arith.constant 0 : index
    %c0_52 = arith.constant 0 : index
    %97 = vector.load %arg15[%c0_51, %c0_52] : memref<1x16xf32, #tpu.memory_space<vmem>>, vector<1x16xf32>
    %98 = vector.broadcast %97 : vector<1x16xf32> to vector<8x16xf32>
    %99 = arith.addf %96, %98 : vector<8x16xf32>
    %c0_53 = arith.constant 0 : index
    %c0_54 = arith.constant 0 : index
    %100 = vector.load %arg16[%c0_53, %c0_54] : memref<128x128xf32, #tpu.memory_space<vmem>>, vector<128x128xf32>
    %cst_55 = arith.constant dense<0.000000e+00> : vector<8x128xf32>
    %101 = tpu.matmul %94, %100, %cst_55 {dimension_numbers = #tpu.dot_dimension_numbers<[1], [0], [0], [1], [0, 0, 1, 1], [], []>} : vector<8x128xf32>, vector<128x128xf32>, vector<8x128xf32> -> vector<8x128xf32>
    %102 = arith.addf %48, %101 : vector<8x128xf32>
    %c0_56 = arith.constant 0 : index
    %c0_57 = arith.constant 0 : index
    %103 = vector.load %arg17[%c0_56, %c0_57] : memref<1x128xf32, #tpu.memory_space<vmem>>, vector<1x128xf32>
    %104 = vector.broadcast %103 : vector<1x128xf32> to vector<8x128xf32>
    %105 = arith.addf %102, %104 : vector<8x128xf32>
    %106 = arith.subf %49, %99 : vector<8x16xf32>
    %cst_58 = arith.constant 0xFF800000 : f32
    %107 = vector.broadcast %cst_58 : f32 to vector<8x2xf32>
    %108 = tpu.concatenate %106, %107 in 1 : vector<8x16xf32>, vector<8x2xf32> -> vector<8x18xf32>
    %109 = vector.extract_strided_slice %108 {offsets = [0, 1], sizes = [8, 16], strides = [1, 1]} : vector<8x18xf32> to vector<8x16xf32>
    %110 = arith.maximumf %106, %109 : vector<8x16xf32>
    %111 = vector.extract_strided_slice %108 {offsets = [0, 2], sizes = [8, 16], strides = [1, 1]} : vector<8x18xf32> to vector<8x16xf32>
    %112 = arith.maximumf %110, %111 : vector<8x16xf32>
    %cst_59 = arith.constant 0xFF800000 : f32
    %113 = vector.broadcast %cst_59 : f32 to vector<8x2xf32>
    %114 = tpu.concatenate %3, %113 in 1 : vector<8x16xf32>, vector<8x2xf32> -> vector<8x18xf32>
    %115 = vector.extract_strided_slice %114 {offsets = [0, 1], sizes = [8, 16], strides = [1, 1]} : vector<8x18xf32> to vector<8x16xf32>
    %116 = arith.maximumf %3, %115 : vector<8x16xf32>
    %117 = vector.extract_strided_slice %114 {offsets = [0, 2], sizes = [8, 16], strides = [1, 1]} : vector<8x18xf32> to vector<8x16xf32>
    %118 = arith.maximumf %116, %117 : vector<8x16xf32>
    %cst_60 = arith.constant 0xFF800000 : f32
    %119 = vector.broadcast %cst_60 : f32 to vector<8x2xf32>
    %120 = tpu.concatenate %5, %119 in 1 : vector<8x16xf32>, vector<8x2xf32> -> vector<8x18xf32>
    %121 = vector.extract_strided_slice %120 {offsets = [0, 1], sizes = [8, 16], strides = [1, 1]} : vector<8x18xf32> to vector<8x16xf32>
    %122 = arith.maximumf %5, %121 : vector<8x16xf32>
    %123 = vector.extract_strided_slice %120 {offsets = [0, 2], sizes = [8, 16], strides = [1, 1]} : vector<8x18xf32> to vector<8x16xf32>
    %124 = arith.maximumf %122, %123 : vector<8x16xf32>
    %cst_61 = arith.constant 0xFF800000 : f32
    %125 = vector.broadcast %cst_61 : f32 to vector<8x2xf32>
    %126 = tpu.concatenate %7, %125 in 1 : vector<8x16xf32>, vector<8x2xf32> -> vector<8x18xf32>
    %127 = vector.extract_strided_slice %126 {offsets = [0, 1], sizes = [8, 16], strides = [1, 1]} : vector<8x18xf32> to vector<8x16xf32>
    %128 = arith.maximumf %7, %127 : vector<8x16xf32>
    %129 = vector.extract_strided_slice %126 {offsets = [0, 2], sizes = [8, 16], strides = [1, 1]} : vector<8x18xf32> to vector<8x16xf32>
    %130 = arith.maximumf %128, %129 : vector<8x16xf32>
    %131 = tpu.concatenate %112, %118, %124, %130 in 1 : vector<8x16xf32>, vector<8x16xf32>, vector<8x16xf32>, vector<8x16xf32> -> vector<8x64xf32>
    %c0_62 = arith.constant 0 : index
    %c0_63 = arith.constant 0 : index
    %132 = vector.load %arg18[%c0_62, %c0_63] : memref<64x128xf32, #tpu.memory_space<vmem>>, vector<64x128xf32>
    %cst_64 = arith.constant dense<0.000000e+00> : vector<8x128xf32>
    %133 = tpu.matmul %131, %132, %cst_64 {dimension_numbers = #tpu.dot_dimension_numbers<[1], [0], [0], [1], [0, 0, 1, 1], [], []>} : vector<8x64xf32>, vector<64x128xf32>, vector<8x128xf32> -> vector<8x128xf32>
    %c0_65 = arith.constant 0 : index
    %c0_66 = arith.constant 0 : index
    %134 = vector.load %arg19[%c0_65, %c0_66] : memref<1x128xf32, #tpu.memory_space<vmem>>, vector<1x128xf32>
    %135 = vector.broadcast %134 : vector<1x128xf32> to vector<8x128xf32>
    %136 = arith.addf %133, %135 : vector<8x128xf32>
    %c0_67 = arith.constant 0 : index
    %c0_68 = arith.constant 0 : index
    %137 = vector.load %arg20[%c0_67, %c0_68] : memref<128x128xf32, #tpu.memory_space<vmem>>, vector<128x128xf32>
    %cst_69 = arith.constant dense<0.000000e+00> : vector<8x128xf32>
    %138 = tpu.matmul %136, %137, %cst_69 {dimension_numbers = #tpu.dot_dimension_numbers<[1], [0], [0], [1], [0, 0, 1, 1], [], []>} : vector<8x128xf32>, vector<128x128xf32>, vector<8x128xf32> -> vector<8x128xf32>
    %c0_70 = arith.constant 0 : index
    %c0_71 = arith.constant 0 : index
    %139 = vector.load %arg21[%c0_70, %c0_71] : memref<1x128xf32, #tpu.memory_space<vmem>>, vector<1x128xf32>
    %140 = vector.broadcast %139 : vector<1x128xf32> to vector<8x128xf32>
    %141 = arith.addf %138, %140 : vector<8x128xf32>
    %cst_72 = arith.constant 0.000000e+00 : f32
    %142 = vector.broadcast %cst_72 : f32 to vector<8x128xf32>
    %143 = arith.maximumf %141, %142 : vector<8x128xf32>
    %c0_73 = arith.constant 0 : index
    %c0_74 = arith.constant 0 : index
    %144 = vector.load %arg24[%c0_73, %c0_74] : memref<128x128xf32, #tpu.memory_space<vmem>>, vector<128x128xf32>
    %cst_75 = arith.constant dense<0.000000e+00> : vector<8x128xf32>
    %145 = tpu.matmul %143, %144, %cst_75 {dimension_numbers = #tpu.dot_dimension_numbers<[1], [0], [0], [1], [0, 0, 1, 1], [], []>} : vector<8x128xf32>, vector<128x128xf32>, vector<8x128xf32> -> vector<8x128xf32>
    %146 = arith.addf %105, %145 : vector<8x128xf32>
    %c0_76 = arith.constant 0 : index
    %c0_77 = arith.constant 0 : index
    %147 = vector.load %arg25[%c0_76, %c0_77] : memref<1x128xf32, #tpu.memory_space<vmem>>, vector<1x128xf32>
    %148 = vector.broadcast %147 : vector<1x128xf32> to vector<8x128xf32>
    %149 = arith.addf %146, %148 : vector<8x128xf32>
    %c0_78 = arith.constant 0 : index
    %c0_79 = arith.constant 0 : index
    %150 = vector.load %arg26[%c0_78, %c0_79] : memref<8x128xf32, #tpu.memory_space<vmem>>, vector<8x128xf32>
    tpu.vector_store %arg26[%c0_78, %c0_79], %149 {strides = array<i32>} : memref<8x128xf32, #tpu.memory_space<vmem>>, vector<8x128xf32>,
    return
  }
  func.func @transform_0(%arg0: i32) -> (i32, i32, i32) {
    %c0_i32 = arith.constant 0 : i32
    %c0_i32_0 = arith.constant 0 : i32
    %c0_i32_1 = arith.constant 0 : i32
    return %c0_i32, %arg0, %c0_i32_0 : i32, i32, i32
  }
  func.func @transform_1(%arg0: i32) -> (i32, i32) {
    %c0_i32 = arith.constant 0 : i32
    %c0_i32_0 = arith.constant 0 : i32
    %c0_i32_1 = arith.constant 0 : i32
    return %c0_i32, %c0_i32_0 : i32, i32
  }
  func.func @transform_2(%arg0: i32) -> (i32, i32) {
    %c0_i32 = arith.constant 0 : i32
    %c0_i32_0 = arith.constant 0 : i32
    %c0_i32_1 = arith.constant 0 : i32
    return %c0_i32, %c0_i32_0 : i32, i32
  }
  func.func @transform_3(%arg0: i32) -> (i32, i32) {
    %c0_i32 = arith.constant 0 : i32
    %c0_i32_0 = arith.constant 0 : i32
    %c0_i32_1 = arith.constant 0 : i32
    return %c0_i32, %c0_i32_0 : i32, i32
  }
  func.func @transform_4(%arg0: i32) -> (i32, i32) {
    %c0_i32 = arith.constant 0 : i32
    %c0_i32_0 = arith.constant 0 : i32
    %c0_i32_1 = arith.constant 0 : i32
    return %c0_i32, %c0_i32_0 : i32, i32
  }
  func.func @transform_5(%arg0: i32) -> (i32, i32) {
    %c0_i32 = arith.constant 0 : i32
    %c0_i32_0 = arith.constant 0 : i32
    %c0_i32_1 = arith.constant 0 : i32
    return %c0_i32, %c0_i32_0 : i32, i32
  }
  func.func @transform_6(%arg0: i32) -> (i32, i32) {
    %c0_i32 = arith.constant 0 : i32
    %c0_i32_0 = arith.constant 0 : i32
    %c0_i32_1 = arith.constant 0 : i32
    return %c0_i32, %c0_i32_0 : i32, i32
  }
  func.func @transform_7(%arg0: i32) -> (i32, i32) {
    %c0_i32 = arith.constant 0 : i32
    %c0_i32_0 = arith.constant 0 : i32
    %c0_i32_1 = arith.constant 0 : i32
    return %c0_i32, %c0_i32_0 : i32, i32
  }
  func.func @transform_8(%arg0: i32) -> (i32, i32) {
    %c0_i32 = arith.constant 0 : i32
    %c0_i32_0 = arith.constant 0 : i32
    %c0_i32_1 = arith.constant 0 : i32
    return %c0_i32, %c0_i32_0 : i32, i32
  }
  func.func @transform_9(%arg0: i32) -> (i32, i32) {
    %c0_i32 = arith.constant 0 : i32
    %c0_i32_0 = arith.constant 0 : i32
    %c0_i32_1 = arith.constant 0 : i32
    return %c0_i32, %c0_i32_0 : i32, i32
  }
  func.func @transform_10(%arg0: i32) -> (i32, i32) {
    %c0_i32 = arith.constant 0 : i32
    %c0_i32_0 = arith.constant 0 : i32
    %c0_i32_1 = arith.constant 0 : i32
    return %c0_i32, %c0_i32_0 : i32, i32
  }
  func.func @transform_11(%arg0: i32) -> (i32, i32) {
    %c0_i32 = arith.constant 0 : i32
    %c0_i32_0 = arith.constant 0 : i32
    %c0_i32_1 = arith.constant 0 : i32
    return %c0_i32, %c0_i32_0 : i32, i32
  }
  func.func @transform_12(%arg0: i32) -> (i32, i32) {
    %c0_i32 = arith.constant 0 : i32
    %c0_i32_0 = arith.constant 0 : i32
    %c0_i32_1 = arith.constant 0 : i32
    return %c0_i32, %c0_i32_0 : i32, i32
  }
  func.func @transform_13(%arg0: i32) -> (i32, i32) {
    %c0_i32 = arith.constant 0 : i32
    %c0_i32_0 = arith.constant 0 : i32
    %c0_i32_1 = arith.constant 0 : i32
    return %c0_i32, %c0_i32_0 : i32, i32
  }
  func.func @transform_14(%arg0: i32) -> (i32, i32) {
    %c0_i32 = arith.constant 0 : i32
    %c0_i32_0 = arith.constant 0 : i32
    %c0_i32_1 = arith.constant 0 : i32
    return %c0_i32, %c0_i32_0 : i32, i32
  }
  func.func @transform_15(%arg0: i32) -> (i32, i32) {
    %c0_i32 = arith.constant 0 : i32
    %c0_i32_0 = arith.constant 0 : i32
    %c0_i32_1 = arith.constant 0 : i32
    return %c0_i32, %c0_i32_0 : i32, i32
  }
  func.func @transform_16(%arg0: i32) -> (i32, i32) {
    %c0_i32 = arith.constant 0 : i32
    %c0_i32_0 = arith.constant 0 : i32
    %c0_i32_1 = arith.constant 0 : i32
    return %c0_i32, %c0_i32_0 : i32, i32
  }
  func.func @transform_17(%arg0: i32) -> (i32, i32) {
    %c0_i32 = arith.constant 0 : i32
    %c0_i32_0 = arith.constant 0 : i32
    %c0_i32_1 = arith.constant 0 : i32
    return %c0_i32, %c0_i32_0 : i32, i32
  }
  func.func @transform_18(%arg0: i32) -> (i32, i32) {
    %c0_i32 = arith.constant 0 : i32
    %c0_i32_0 = arith.constant 0 : i32
    %c0_i32_1 = arith.constant 0 : i32
    return %c0_i32, %c0_i32_0 : i32, i32
  }
  func.func @transform_19(%arg0: i32) -> (i32, i32) {
    %c0_i32 = arith.constant 0 : i32
    %c0_i32_0 = arith.constant 0 : i32
    %c0_i32_1 = arith.constant 0 : i32
    return %c0_i32, %c0_i32_0 : i32, i32
  }
  func.func @transform_20(%arg0: i32) -> (i32, i32) {
    %c0_i32 = arith.constant 0 : i32
    %c0_i32_0 = arith.constant 0 : i32
    %c0_i32_1 = arith.constant 0 : i32
    return %c0_i32, %c0_i32_0 : i32, i32
  }
  func.func @transform_21(%arg0: i32) -> (i32, i32) {
    %c0_i32 = arith.constant 0 : i32
    %c0_i32_0 = arith.constant 0 : i32
    %c0_i32_1 = arith.constant 0 : i32
    return %c0_i32, %c0_i32_0 : i32, i32
  }
  func.func @transform_22(%arg0: i32) -> (i32, i32) {
    %c0_i32 = arith.constant 0 : i32
    %c0_i32_0 = arith.constant 0 : i32
    %c0_i32_1 = arith.constant 0 : i32
    return %c0_i32, %c0_i32_0 : i32, i32
  }
  func.func @transform_23(%arg0: i32) -> (i32, i32) {
    %c0_i32 = arith.constant 0 : i32
    %c0_i32_0 = arith.constant 0 : i32
    %c0_i32_1 = arith.constant 0 : i32
    return %c0_i32, %c0_i32_0 : i32, i32
  }
  func.func @transform_24(%arg0: i32) -> (i32, i32) {
    %c0_i32 = arith.constant 0 : i32
    %c0_i32_0 = arith.constant 0 : i32
    %c0_i32_1 = arith.constant 0 : i32
    return %c0_i32, %c0_i32_0 : i32, i32
  }
  func.func @transform_25(%arg0: i32) -> (i32, i32) {
    %c0_i32 = arith.constant 0 : i32
    %c0_i32_0 = arith.constant 0 : i32
    return %arg0, %c0_i32 : i32, i32
  }
}

</mosaic_0001>

<llo_original>
// kernel: _forward.1
$region0: #{_forward.1}
  #allocation0 [shape = 'u32[]', space=smem, size = 0x4, offset = 0x4, fixed_abs, tag = 'smem constant byte address 0x4 - core index']
  #allocation1 [shape = 'u32[144,128]{1,0:T(1,128)}', space=vmem, size = 0x12000, scoped, tag = 'internal scratch']
  %s0 = inlined_call_operand.vmem [shape: f32[4,8,16], index: 0, kind: input, shape index: {}]
  %s1 = inlined_call_operand.hbm [shape: f32[64,128], index: 1, kind: input, shape index: {}]
  %s2 = inlined_call_operand.vmem [shape: f32[1,128], index: 2, kind: input, shape index: {}]
  %s3 = inlined_call_operand.vmem [shape: f32[128,128], index: 3, kind: input, shape index: {}]
  %s4 = inlined_call_operand.vmem [shape: f32[1,128], index: 4, kind: input, shape index: {}]
  %s5 = inlined_call_operand.vmem [shape: f32[128,16], index: 5, kind: input, shape index: {}]
  %s6 = inlined_call_operand.hbm [shape: f32[1,16], index: 6, kind: input, shape index: {}]
  %s7 = inlined_call_operand.vmem [shape: f32[128,128], index: 7, kind: input, shape index: {}]
  %s8 = inlined_call_operand.hbm [shape: f32[1,128], index: 8, kind: input, shape index: {}]
  %s9 = inlined_call_operand.hbm [shape: f32[64,128], index: 9, kind: input, shape index: {}]
  %s10 = inlined_call_operand.hbm [shape: f32[1,128], index: 10, kind: input, shape index: {}]
  %s11 = inlined_call_operand.vmem [shape: f32[128,128], index: 11, kind: input, shape index: {}]
  %s12 = inlined_call_operand.vmem [shape: f32[1,128], index: 12, kind: input, shape index: {}]
  %s13 = inlined_call_operand.vmem [shape: f32[128,16], index: 13, kind: input, shape index: {}]
  %s14 = inlined_call_operand.vmem [shape: f32[1,16], index: 14, kind: input, shape index: {}]
  %s15 = inlined_call_operand.vmem [shape: f32[128,128], index: 15, kind: input, shape index: {}]
  %s16 = inlined_call_operand.vmem [shape: f32[1,128], index: 16, kind: input, shape index: {}]
  %s17 = inlined_call_operand.hbm [shape: f32[64,128], index: 17, kind: input, shape index: {}]
  %s18 = inlined_call_operand.vmem [shape: f32[1,128], index: 18, kind: input, shape index: {}]
  %s19 = inlined_call_operand.hbm [shape: f32[128,128], index: 19, kind: input, shape index: {}]
  %s20 = inlined_call_operand.vmem [shape: f32[1,128], index: 20, kind: input, shape index: {}]
  %s21 = inlined_call_operand.vmem [shape: f32[128,16], index: 21, kind: input, shape index: {}]
  %s22 = inlined_call_operand.vmem [shape: f32[1,16], index: 22, kind: input, shape index: {}]
  %s23 = inlined_call_operand.hbm [shape: f32[128,128], index: 23, kind: input, shape index: {}]
  %s24 = inlined_call_operand.vmem [shape: f32[1,128], index: 24, kind: input, shape index: {}]
  %s25 = inlined_call_operand.vmem [shape: f32[8,128], index: 25, kind: output, shape index: {}]
  %s26 = sld [smem:[#allocation0]]
  $region142: #{_forward.1} parent=0
    _
  %s28 = ssub.s32 1, %s26
  %s29 = scalar_select 0, %s28, %s26
  $region1: #{_forward.1} parent=0
    #allocation2 [shape = 'u8[32768]{0}', space=vmem, size = 0x8000, scoped, tag = 'input window, operand 1, single buffered']
    #allocation3 [shape = 's32[1]{0}', space=sflag, size = 0x4, scoped, tag = 'scoped memory for _forward.1']
    #allocation4 [shape = 'u8[512]{0}', space=vmem, size = 0x400, scoped, tag = 'input window, operand 6, single buffered']
    #allocation5 [shape = 's32[1]{0}', space=sflag, size = 0x4, scoped, tag = 'scoped memory for _forward.1']
    #allocation6 [shape = 'u8[512]{0}', space=vmem, size = 0x400, scoped, tag = 'input window, operand 8, single buffered']
    #allocation7 [shape = 'u8[32768]{0}', space=vmem, size = 0x8000, scoped, tag = 'input window, operand 9, single buffered']
    #allocation8 [shape = 's32[1]{0}', space=sflag, size = 0x4, scoped, tag = 'scoped memory for _forward.1']
    #allocation9 [shape = 'u8[512]{0}', space=vmem, size = 0x400, scoped, tag = 'input window, operand 10, single buffered']
    #allocation10 [shape = 'u8[32768]{0}', space=vmem, size = 0x8000, scoped, tag = 'input window, operand 17, single buffered']
    #allocation11 [shape = 's32[1]{0}', space=sflag, size = 0x4, scoped, tag = 'scoped memory for _forward.1']
    #allocation12 [shape = 'u8[65536]{0}', space=vmem, size = 0x10000, scoped, tag = 'input window, operand 19, single buffered']
    #allocation13 [shape = 'u8[65536]{0}', space=vmem, size = 0x10000, scoped, tag = 'input window, operand 23, single buffered']
    #allocation14 [shape = 's32[1]{0}', space=sflag, size = 0x4, scoped, tag = 'scoped memory for _forward.1']
    %30 = vsyncpa [#allocation3], 0
    %31 = vsyncpa [#allocation5], 0
    %32 = vsyncpa [#allocation8], 0
    %33 = vsyncpa [#allocation11], 0
    %34 = vsyncpa [#allocation14], 0
    // Predicated region
    $region2: #{_forward.1} parent=1 // pred_check
      _
    $region3: #{_forward.1} parent=1 // pred_check_branch
      %36 = sbr.rel (0) target = $region5
    $region4: #{_forward.1} parent=1 // pred_region
      _
    $region5: #{_forward.1} parent=1 // pred_fallthru
      _
    // Predicated region
    $region6: #{_forward.1} parent=1 // pred_check
      _
    $region7: #{_forward.1} parent=1 // pred_check_branch
      %38 = sbr.rel (0) target = $region9
    $region8: #{_forward.1} parent=1 // pred_region
      %s40 = ssub.s32 1024, 1024
      %41 = vsyncadd [#allocation3], %s40
      %s42 = sshll.u32 [#allocation2], 4
      %s43 = int_to_ptr.vmem [resolvable:$true] %s42
      %48 = dma.hbm_to_vmem [thread:$0]  %s1, 1024, %s43, [#allocation3], 128, 128, 8
    $region9: #{_forward.1} parent=1 // pred_fallthru
      _
    // Predicated region
    $region10: #{_forward.1} parent=1 // pred_check
      _
    $region11: #{_forward.1} parent=1 // pred_check_branch
      %50 = sbr.rel (0) target = $region13
    $region12: #{_forward.1} parent=1 // pred_region
      _
    $region13: #{_forward.1} parent=1 // pred_fallthru
      _
    // Predicated region
    $region14: #{_forward.1} parent=1 // pred_check
      _
    $region15: #{_forward.1} parent=1 // pred_check_branch
      %52 = sbr.rel (0) target = $region17
    $region16: #{_forward.1} parent=1 // pred_region
      _
    $region17: #{_forward.1} parent=1 // pred_fallthru
      _
    // Predicated region
    $region18: #{_forward.1} parent=1 // pred_check
      _
    $region19: #{_forward.1} parent=1 // pred_check_branch
      %54 = sbr.rel (0) target = $region21
    $region20: #{_forward.1} parent=1 // pred_region
      _
    $region21: #{_forward.1} parent=1 // pred_fallthru
      _
    // Predicated region
    $region22: #{_forward.1} parent=1 // pred_check
      _
    $region23: #{_forward.1} parent=1 // pred_check_branch
      %56 = sbr.rel (0) target = $region25
    $region24: #{_forward.1} parent=1 // pred_region
      _
    $region25: #{_forward.1} parent=1 // pred_fallthru
      _
    // Predicated region
    $region26: #{_forward.1} parent=1 // pred_check
      _
    $region27: #{_forward.1} parent=1 // pred_check_branch
      %58 = sbr.rel (0) target = $region29
    $region28: #{_forward.1} parent=1 // pred_region
      %s60 = ssub.s32 16, 16
      %61 = vsyncadd [#allocation5], %s60
      %s63 = sshll.u32 [#allocation4], 4
      %s64 = int_to_ptr.vmem [resolvable:$true] %s63
      %66 = dma.hbm_to_vmem [thread:$0]  %s6, 16, %s64, [#allocation5]
    $region29: #{_forward.1} parent=1 // pred_fallthru
      _
    // Predicated region
    $region30: #{_forward.1} parent=1 // pred_check
      _
    $region31: #{_forward.1} parent=1 // pred_check_branch
      %68 = sbr.rel (0) target = $region33
    $region32: #{_forward.1} parent=1 // pred_region
      _
    $region33: #{_forward.1} parent=1 // pred_fallthru
      _
    // Predicated region
    $region34: #{_forward.1} parent=1 // pred_check
      _
    $region35: #{_forward.1} parent=1 // pred_check_branch
      %70 = sbr.rel (0) target = $region37
    $region36: #{_forward.1} parent=1 // pred_region
      %s72 = ssub.s32 16, 16
      %73 = vsyncadd [#allocation5], %s72
      %s75 = sshll.u32 [#allocation6], 4
      %s76 = int_to_ptr.vmem [resolvable:$true] %s75
      %78 = dma.hbm_to_vmem [thread:$0]  %s8, 16, %s76, [#allocation5]
    $region37: #{_forward.1} parent=1 // pred_fallthru
      _
    // Predicated region
    $region38: #{_forward.1} parent=1 // pred_check
      _
    $region39: #{_forward.1} parent=1 // pred_check_branch
      %80 = sbr.rel (0) target = $region41
    $region40: #{_forward.1} parent=1 // pred_region
      %s82 = ssub.s32 1024, 1024
      %83 = vsyncadd [#allocation8], %s82
      %s84 = sshll.u32 [#allocation7], 4
      %s85 = int_to_ptr.vmem [resolvable:$true] %s84
      %90 = dma.hbm_to_vmem [thread:$0]  %s9, 1024, %s85, [#allocation8], 128, 128, 8
    $region41: #{_forward.1} parent=1 // pred_fallthru
      _
    // Predicated region
    $region42: #{_forward.1} parent=1 // pred_check
      _
    $region43: #{_forward.1} parent=1 // pred_check_branch
      %92 = sbr.rel (0) target = $region45
    $region44: #{_forward.1} parent=1 // pred_region
      %s94 = ssub.s32 16, 16
      %95 = vsyncadd [#allocation8], %s94
      %s97 = sshll.u32 [#allocation9], 4
      %s98 = int_to_ptr.vmem [resolvable:$true] %s97
      %100 = dma.hbm_to_vmem [thread:$0]  %s10, 16, %s98, [#allocation8]
    $region45: #{_forward.1} parent=1 // pred_fallthru
      _
    // Predicated region
    $region46: #{_forward.1} parent=1 // pred_check
      _
    $region47: #{_forward.1} parent=1 // pred_check_branch
      %102 = sbr.rel (0) target = $region49
    $region48: #{_forward.1} parent=1 // pred_region
      _
    $region49: #{_forward.1} parent=1 // pred_fallthru
      _
    // Predicated region
    $region50: #{_forward.1} parent=1 // pred_check
      _
    $region51: #{_forward.1} parent=1 // pred_check_branch
      %104 = sbr.rel (0) target = $region53
    $region52: #{_forward.1} parent=1 // pred_region
      _
    $region53: #{_forward.1} parent=1 // pred_fallthru
      _
    // Predicated region
    $region54: #{_forward.1} parent=1 // pred_check
      _
    $region55: #{_forward.1} parent=1 // pred_check_branch
      %106 = sbr.rel (0) target = $region57
    $region56: #{_forward.1} parent=1 // pred_region
      _
    $region57: #{_forward.1} parent=1 // pred_fallthru
      _
    // Predicated region
    $region58: #{_forward.1} parent=1 // pred_check
      _
    $region59: #{_forward.1} parent=1 // pred_check_branch
      %108 = sbr.rel (0) target = $region61
    $region60: #{_forward.1} parent=1 // pred_region
      _
    $region61: #{_forward.1} parent=1 // pred_fallthru
      _
    // Predicated region
    $region62: #{_forward.1} parent=1 // pred_check
      _
    $region63: #{_forward.1} parent=1 // pred_check_branch
      %110 = sbr.rel (0) target = $region65
    $region64: #{_forward.1} parent=1 // pred_region
      _
    $region65: #{_forward.1} parent=1 // pred_fallthru
      _
    // Predicated region
    $region66: #{_forward.1} parent=1 // pred_check
      _
    $region67: #{_forward.1} parent=1 // pred_check_branch
      %112 = sbr.rel (0) target = $region69
    $region68: #{_forward.1} parent=1 // pred_region
      _
    $region69: #{_forward.1} parent=1 // pred_fallthru
      _
    // Predicated region
    $region70: #{_forward.1} parent=1 // pred_check
      _
    $region71: #{_forward.1} parent=1 // pred_check_branch
      %114 = sbr.rel (0) target = $region73
    $region72: #{_forward.1} parent=1 // pred_region
      %s116 = ssub.s32 1024, 1024
      %117 = vsyncadd [#allocation11], %s116
      %s118 = sshll.u32 [#allocation10], 4
      %s119 = int_to_ptr.vmem [resolvable:$true] %s118
      %124 = dma.hbm_to_vmem [thread:$0]  %s17, 1024, %s119, [#allocation11], 128, 128, 8
    $region73: #{_forward.1} parent=1 // pred_fallthru
      _
    // Predicated region
    $region74: #{_forward.1} parent=1 // pred_check
      _
    $region75: #{_forward.1} parent=1 // pred_check_branch
      %126 = sbr.rel (0) target = $region77
    $region76: #{_forward.1} parent=1 // pred_region
      _
    $region77: #{_forward.1} parent=1 // pred_fallthru
      _
    // Predicated region
    $region78: #{_forward.1} parent=1 // pred_check
      _
    $region79: #{_forward.1} parent=1 // pred_check_branch
      %128 = sbr.rel (0) target = $region81
    $region80: #{_forward.1} parent=1 // pred_region
      %s130 = ssub.s32 2048, 2048
      %131 = vsyncadd [#allocation11], %s130
      %s132 = sshll.u32 [#allocation12], 4
      %s133 = int_to_ptr.vmem [resolvable:$true] %s132
      %138 = dma.hbm_to_vmem [thread:$0]  %s19, 2048, %s133, [#allocation11], 128, 128, 8
    $region81: #{_forward.1} parent=1 // pred_fallthru
      _
    // Predicated region
    $region82: #{_forward.1} parent=1 // pred_check
      _
    $region83: #{_forward.1} parent=1 // pred_check_branch
      %140 = sbr.rel (0) target = $region85
    $region84: #{_forward.1} parent=1 // pred_region
      _
    $region85: #{_forward.1} parent=1 // pred_fallthru
      _
    // Predicated region
    $region86: #{_forward.1} parent=1 // pred_check
      _
    $region87: #{_forward.1} parent=1 // pred_check_branch
      %142 = sbr.rel (0) target = $region89
    $region88: #{_forward.1} parent=1 // pred_region
      _
    $region89: #{_forward.1} parent=1 // pred_fallthru
      _
    // Predicated region
    $region90: #{_forward.1} parent=1 // pred_check
      _
    $region91: #{_forward.1} parent=1 // pred_check_branch
      %144 = sbr.rel (0) target = $region93
    $region92: #{_forward.1} parent=1 // pred_region
      _
    $region93: #{_forward.1} parent=1 // pred_fallthru
      _
    // Predicated region
    $region94: #{_forward.1} parent=1 // pred_check
      _
    $region95: #{_forward.1} parent=1 // pred_check_branch
      %146 = sbr.rel (0) target = $region97
    $region96: #{_forward.1} parent=1 // pred_region
      %s148 = ssub.s32 2048, 2048
      %149 = vsyncadd [#allocation14], %s148
      %s150 = sshll.u32 [#allocation13], 4
      %s151 = int_to_ptr.vmem [resolvable:$true] %s150
      %156 = dma.hbm_to_vmem [thread:$0]  %s23, 2048, %s151, [#allocation14], 128, 128, 8
    $region97: #{_forward.1} parent=1 // pred_fallthru
      _
    // Predicated region
    $region98: #{_forward.1} parent=1 // pred_check
      _
    $region99: #{_forward.1} parent=1 // pred_check_branch
      %158 = sbr.rel (0) target = $region101
    $region100: #{_forward.1} parent=1 // pred_region
      _
    $region101: #{_forward.1} parent=1 // pred_fallthru
      _
    // Predicated region
    $region102: #{_forward.1} parent=1 // pred_check
      _
    $region103: #{_forward.1} parent=1 // pred_check_branch
      %160 = sbr.rel (0) target = $region105
    $region104: #{_forward.1} parent=1 // pred_region
      %161 = dma.done [#allocation3], 1024
    $region105: #{_forward.1} parent=1 // pred_fallthru
      _
    // Predicated region
    $region106: #{_forward.1} parent=1 // pred_check
      _
    $region107: #{_forward.1} parent=1 // pred_check_branch
      %163 = sbr.rel (0) target = $region109
    $region108: #{_forward.1} parent=1 // pred_region
      %164 = dma.done [#allocation5], 16
    $region109: #{_forward.1} parent=1 // pred_fallthru
      _
    // Predicated region
    $region110: #{_forward.1} parent=1 // pred_check
      _
    $region111: #{_forward.1} parent=1 // pred_check_branch
      %166 = sbr.rel (0) target = $region113
    $region112: #{_forward.1} parent=1 // pred_region
      %167 = dma.done [#allocation5], 16
    $region113: #{_forward.1} parent=1 // pred_fallthru
      _
    // Predicated region
    $region114: #{_forward.1} parent=1 // pred_check
      _
    $region115: #{_forward.1} parent=1 // pred_check_branch
      %169 = sbr.rel (0) target = $region117
    $region116: #{_forward.1} parent=1 // pred_region
      %170 = dma.done [#allocation8], 1024
    $region117: #{_forward.1} parent=1 // pred_fallthru
      _
    // Predicated region
    $region118: #{_forward.1} parent=1 // pred_check
      _
    $region119: #{_forward.1} parent=1 // pred_check_branch
      %172 = sbr.rel (0) target = $region121
    $region120: #{_forward.1} parent=1 // pred_region
      %173 = dma.done [#allocation8], 16
    $region121: #{_forward.1} parent=1 // pred_fallthru
      _
    // Predicated region
    $region122: #{_forward.1} parent=1 // pred_check
      _
    $region123: #{_forward.1} parent=1 // pred_check_branch
      %175 = sbr.rel (0) target = $region125
    $region124: #{_forward.1} parent=1 // pred_region
      %176 = dma.done [#allocation11], 1024
    $region125: #{_forward.1} parent=1 // pred_fallthru
      _
    // Predicated region
    $region126: #{_forward.1} parent=1 // pred_check
      _
    $region127: #{_forward.1} parent=1 // pred_check_branch
      %178 = sbr.rel (0) target = $region129
    $region128: #{_forward.1} parent=1 // pred_region
      %179 = dma.done [#allocation11], 2048
    $region129: #{_forward.1} parent=1 // pred_fallthru
      _
    // Predicated region
    $region130: #{_forward.1} parent=1 // pred_check
      _
    $region131: #{_forward.1} parent=1 // pred_check_branch
      %181 = sbr.rel (0) target = $region133
    $region132: #{_forward.1} parent=1 // pred_region
      %182 = dma.done [#allocation14], 2048
    $region133: #{_forward.1} parent=1 // pred_fallthru
      _
    %v183 = vld [vmem:[%s0] sm:$0xff]
    %s184 = scalar_lea.vmem %s0, 8
    %v185 = vld [vmem:[%s184] sm:$0xff]
    %s186 = scalar_lea.vmem %s0, 16
    %v187 = vld [vmem:[%s186] sm:$0xff]
    %s188 = scalar_lea.vmem %s0, 24
    %v189 = vld [vmem:[%s188] sm:$0xff]
    %vm190 = vcmask 130048
    %v191 = vsel %vm190, %v183, -inf
    %193 = vrot.lane.b32.xlu0 %v191, 127
    %v194 = vpop.permute.xlu0 %193
    %v196 = vmax.f32 %v183, %v194
    %v197 = vsel %vm190, %v185, -inf
    %199 = vrot.lane.b32.xlu0 %v197, 127
    %v200 = vpop.permute.xlu0 %199
    %v202 = vmax.f32 %v185, %v200
    %v203 = vsel %vm190, %v187, -inf
    %205 = vrot.lane.b32.xlu0 %v203, 127
    %v206 = vpop.permute.xlu0 %205
    %v208 = vmax.f32 %v187, %v206
    %v209 = vsel %vm190, %v189, -inf
    %211 = vrot.lane.b32.xlu0 %v209, 127
    %v212 = vpop.permute.xlu0 %211
    %v214 = vmax.f32 %v189, %v212
    %216 = vrot.lane.b32.xlu0 %v202, 16
    %v217 = vpop.permute.xlu0 %216
    %220 = vrot.lane.b32.xlu0 %v208, 32
    %v221 = vpop.permute.xlu0 %220
    %224 = vrot.lane.b32.xlu0 %v214, 48
    %v225 = vpop.permute.xlu0 %224
    %v227 = vsel %vm190, %v196, %v217
    %vm228 = vcmask 261120
    %v229 = vsel %vm228, %v227, %v221
    %vm230 = vcmask 392192
    %v231 = vsel %vm230, %v229, %v225
    %v232 = vld [vmem:[#allocation2] sm:$0xff]
    %v233 = vld [vmem:[#allocation2 + $0x8] sm:$0xff]
    %v234 = vld [vmem:[#allocation2 + $0x10] sm:$0xff]
    %v235 = vld [vmem:[#allocation2 + $0x18] sm:$0xff]
    %v236 = vld [vmem:[#allocation2 + $0x20] sm:$0xff]
    %v237 = vld [vmem:[#allocation2 + $0x28] sm:$0xff]
    %v238 = vld [vmem:[#allocation2 + $0x30] sm:$0xff]
    %v239 = vld [vmem:[#allocation2 + $0x38] sm:$0xff]
    %v240 = vld [vmem:[%s2] sm:$0x1]
    %v242 = vlaneseq
    %v243 = vshrl.u32 %v242, 7
    %v244 = vsub.s32 0, %v243
    %v245 = vrot.slane %v240, %v244
    %vm247 = vcmask 523264
    %v249 = vsel %vm247, %v231, 0
    %251 = vmatprep.subr.mxu0 0.0
    %252 = vmatpush1.msra.mxu0 %v232
    %253 = vmatprep.subr.mxu0 0.0
    %254 = vmatpush1.msra.mxu0 %v233
    %255 = vmatprep.subr.mxu0 0.0
    %256 = vmatpush1.msra.mxu0 %v234
    %257 = vmatprep.subr.mxu0 0.0
    %258 = vmatpush1.msra.mxu0 %v235
    %259 = vmatprep.subr.mxu0 0.0
    %260 = vmatpush1.msra.mxu0 %v236
    %261 = vmatprep.subr.mxu0 0.0
    %262 = vmatpush1.msra.mxu0 %v237
    %263 = vmatprep.subr.mxu0 0.0
    %264 = vmatpush1.msra.mxu0 %v238
    %265 = vmatprep.subr.mxu0 0.0
    %266 = vmatpush1.msra.mxu0 %v239
    %267 = vmatprep.subr.mxu0 0.0
    %268 = vmatpush1.msra.mxu0 0.0
    %269 = vmatprep.subr.mxu0 0.0
    %270 = vmatpush1.msra.mxu0 0.0
    %271 = vmatprep.subr.mxu0 0.0
    %272 = vmatpush1.msra.mxu0 0.0
    %273 = vmatprep.subr.mxu0 0.0
    %274 = vmatpush1.msra.mxu0 0.0
    %275 = vmatprep.subr.mxu0 0.0
    %276 = vmatpush1.msra.mxu0 0.0
    %277 = vmatprep.subr.mxu0 0.0
    %278 = vmatpush1.msra.mxu0 0.0
    %279 = vmatprep.subr.mxu0 0.0
    %280 = vmatpush1.msra.mxu0 0.0
    %281 = vmatprep.subr.mxu0 0.0
    %282 = vmatpush1.msra.mxu0 0.0
    %283 = vmatprep.subr.mxu0 0.0
    %284 = vmatpush1.msra.mxu0 0.0
    %285 = vmatprep.subr.mxu0 0.0
    %286 = vmatpush1.msra.mxu0 0.0
    %287 = vmatprep.subr.mxu0 0.0
    %288 = vmatpush1.msra.mxu0 0.0
    %289 = vmatprep.subr.mxu0 0.0
    %290 = vmatpush1.msra.mxu0 0.0
    %291 = vmatprep.subr.mxu0 0.0
    %292 = vmatpush1.msra.mxu0 0.0
    %293 = vmatprep.subr.mxu0 0.0
    %294 = vmatpush1.msra.mxu0 0.0
    %295 = vmatprep.subr.mxu0 0.0
    %296 = vmatpush1.msra.mxu0 0.0
    %297 = vmatprep.subr.mxu0 0.0
    %298 = vmatpush1.msra.mxu0 0.0
    %299 = vmatprep.subr.mxu0 0.0
    %300 = vmatpush1.msra.mxu0 0.0
    %301 = vmatprep.subr.mxu0 0.0
    %302 = vmatpush1.msra.mxu0 0.0
    %303 = vmatprep.subr.mxu0 0.0
    %304 = vmatpush1.msra.mxu0 0.0
    %305 = vmatprep.subr.mxu0 0.0
    %306 = vmatpush1.msra.mxu0 0.0
    %307 = vmatprep.subr.mxu0 0.0
    %308 = vmatpush1.msra.mxu0 0.0
    %309 = vmatprep.subr.mxu0 0.0
    %310 = vmatpush1.msra.mxu0 0.0
    %311 = vmatprep.subr.mxu0 0.0
    %312 = vmatpush1.msra.mxu0 0.0
    %313 = vmatprep.subr.mxu0 0.0
    %314 = vmatpush1.msra.mxu0 0.0
    %315 = vmatprep.mubr.f32.mxu0 0.0
    %316 = vmatmul.mubr.f32.gmra.mrb[0].mxu0 %v249
    %v317 = vpop.f32.mrb[0].mxu0
    %v318 = vadd.f32 %v245, %v317
    %v319 = vpop.f32.mrb[0].mxu0
    %320 = vdwg.mxu0
    %v321 = vld [vmem:[%s3] sm:$0xff]
    %v322 = vld [vmem:[%s3 + $0x8] sm:$0xff]
    %v323 = vld [vmem:[%s3 + $0x10] sm:$0xff]
    %v324 = vld [vmem:[%s3 + $0x18] sm:$0xff]
    %v325 = vld [vmem:[%s3 + $0x20] sm:$0xff]
    %v326 = vld [vmem:[%s3 + $0x28] sm:$0xff]
    %v327 = vld [vmem:[%s3 + $0x30] sm:$0xff]
    %v328 = vld [vmem:[%s3 + $0x38] sm:$0xff]
    %v329 = vld [vmem:[%s3 + $0x40] sm:$0xff]
    %v330 = vld [vmem:[%s3 + $0x48] sm:$0xff]
    %v331 = vld [vmem:[%s3 + $0x50] sm:$0xff]
    %v332 = vld [vmem:[%s3 + $0x58] sm:$0xff]
    %v333 = vld [vmem:[%s3 + $0x60] sm:$0xff]
    %v334 = vld [vmem:[%s3 + $0x68] sm:$0xff]
    %v335 = vld [vmem:[%s3 + $0x70] sm:$0xff]
    %v336 = vld [vmem:[%s3 + $0x78] sm:$0xff]
    %v337 = vld [vmem:[%s4] sm:$0x1]
    %v339 = vlaneseq
    %v340 = vshrl.u32 %v339, 7
    %v341 = vsub.s32 0, %v340
    %v342 = vrot.slane %v337, %v341
    %344 = vmatprep.subr.mxu0 0.0
    %345 = vmatpush1.msra.mxu0 %v321
    %346 = vmatprep.subr.mxu0 0.0
    %347 = vmatpush1.msra.mxu0 %v322
    %348 = vmatprep.subr.mxu0 0.0
    %349 = vmatpush1.msra.mxu0 %v323
    %350 = vmatprep.subr.mxu0 0.0
    %351 = vmatpush1.msra.mxu0 %v324
    %352 = vmatprep.subr.mxu0 0.0
    %353 = vmatpush1.msra.mxu0 %v325
    %354 = vmatprep.subr.mxu0 0.0
    %355 = vmatpush1.msra.mxu0 %v326
    %356 = vmatprep.subr.mxu0 0.0
    %357 = vmatpush1.msra.mxu0 %v327
    %358 = vmatprep.subr.mxu0 0.0
    %359 = vmatpush1.msra.mxu0 %v328
    %360 = vmatprep.subr.mxu0 0.0
    %361 = vmatpush1.msra.mxu0 %v329
    %362 = vmatprep.subr.mxu0 0.0
    %363 = vmatpush1.msra.mxu0 %v330
    %364 = vmatprep.subr.mxu0 0.0
    %365 = vmatpush1.msra.mxu0 %v331
    %366 = vmatprep.subr.mxu0 0.0
    %367 = vmatpush1.msra.mxu0 %v332
    %368 = vmatprep.subr.mxu0 0.0
    %369 = vmatpush1.msra.mxu0 %v333
    %370 = vmatprep.subr.mxu0 0.0
    %371 = vmatpush1.msra.mxu0 %v334
    %372 = vmatprep.subr.mxu0 0.0
    %373 = vmatpush1.msra.mxu0 %v335
    %374 = vmatprep.subr.mxu0 0.0
    %375 = vmatpush1.msra.mxu0 %v336
    %376 = vmatprep.subr.mxu0 0.0
    %377 = vmatpush1.msra.mxu0 0.0
    %378 = vmatprep.subr.mxu0 0.0
    %379 = vmatpush1.msra.mxu0 0.0
    %380 = vmatprep.subr.mxu0 0.0
    %381 = vmatpush1.msra.mxu0 0.0
    %382 = vmatprep.subr.mxu0 0.0
    %383 = vmatpush1.msra.mxu0 0.0
    %384 = vmatprep.subr.mxu0 0.0
    %385 = vmatpush1.msra.mxu0 0.0
    %386 = vmatprep.subr.mxu0 0.0
    %387 = vmatpush1.msra.mxu0 0.0
    %388 = vmatprep.subr.mxu0 0.0
    %389 = vmatpush1.msra.mxu0 0.0
    %390 = vmatprep.subr.mxu0 0.0
    %391 = vmatpush1.msra.mxu0 0.0
    %392 = vmatprep.subr.mxu0 0.0
    %393 = vmatpush1.msra.mxu0 0.0
    %394 = vmatprep.subr.mxu0 0.0
    %395 = vmatpush1.msra.mxu0 0.0
    %396 = vmatprep.subr.mxu0 0.0
    %397 = vmatpush1.msra.mxu0 0.0
    %398 = vmatprep.subr.mxu0 0.0
    %399 = vmatpush1.msra.mxu0 0.0
    %400 = vmatprep.subr.mxu0 0.0
    %401 = vmatpush1.msra.mxu0 0.0
    %402 = vmatprep.subr.mxu0 0.0
    %403 = vmatpush1.msra.mxu0 0.0
    %404 = vmatprep.subr.mxu0 0.0
    %405 = vmatpush1.msra.mxu0 0.0
    %406 = vmatprep.subr.mxu0 0.0
    %407 = vmatpush1.msra.mxu0 0.0
    %408 = vmatprep.mubr.f32.mxu0 0.0
    %409 = vmatmul.mubr.f32.gmra.mrb[0].mxu0 %v318
    %v410 = vpop.f32.mrb[0].mxu0
    %v411 = vadd.f32 %v342, %v410
    %v412 = vpop.f32.mrb[0].mxu0
    %413 = vdwg.mxu0
    %v414 = vmax.f32 %v411, 0.0
    %v415 = vld [vmem:[%s5] sm:$0xff]
    %v416 = vld [vmem:[%s5 + $0x8] sm:$0xff]
    %v417 = vld [vmem:[%s5 + $0x10] sm:$0xff]
    %v418 = vld [vmem:[%s5 + $0x18] sm:$0xff]
    %v419 = vld [vmem:[%s5 + $0x20] sm:$0xff]
    %v420 = vld [vmem:[%s5 + $0x28] sm:$0xff]
    %v421 = vld [vmem:[%s5 + $0x30] sm:$0xff]
    %v422 = vld [vmem:[%s5 + $0x38] sm:$0xff]
    %v423 = vld [vmem:[%s5 + $0x40] sm:$0xff]
    %v424 = vld [vmem:[%s5 + $0x48] sm:$0xff]
    %v425 = vld [vmem:[%s5 + $0x50] sm:$0xff]
    %v426 = vld [vmem:[%s5 + $0x58] sm:$0xff]
    %v427 = vld [vmem:[%s5 + $0x60] sm:$0xff]
    %v428 = vld [vmem:[%s5 + $0x68] sm:$0xff]
    %v429 = vld [vmem:[%s5 + $0x70] sm:$0xff]
    %v430 = vld [vmem:[%s5 + $0x78] sm:$0xff]
    %v431 = vld [vmem:[#allocation4] sm:$0x1]
    %v433 = vlaneseq
    %v434 = vshrl.u32 %v433, 7
    %v435 = vsub.s32 0, %v434
    %v436 = vrot.slane %v431, %v435
    %438 = vmatprep.subr.mxu0 0.0
    %439 = vmatpush1.msra.mxu0 %v415
    %440 = vmatprep.subr.mxu0 0.0
    %441 = vmatpush1.msra.mxu0 %v416
    %442 = vmatprep.subr.mxu0 0.0
    %443 = vmatpush1.msra.mxu0 %v417
    %444 = vmatprep.subr.mxu0 0.0
    %445 = vmatpush1.msra.mxu0 %v418
    %446 = vmatprep.subr.mxu0 0.0
    %447 = vmatpush1.msra.mxu0 %v419
    %448 = vmatprep.subr.mxu0 0.0
    %449 = vmatpush1.msra.mxu0 %v420
    %450 = vmatprep.subr.mxu0 0.0
    %451 = vmatpush1.msra.mxu0 %v421
    %452 = vmatprep.subr.mxu0 0.0
    %453 = vmatpush1.msra.mxu0 %v422
    %454 = vmatprep.subr.mxu0 0.0
    %455 = vmatpush1.msra.mxu0 %v423
    %456 = vmatprep.subr.mxu0 0.0
    %457 = vmatpush1.msra.mxu0 %v424
    %458 = vmatprep.subr.mxu0 0.0
    %459 = vmatpush1.msra.mxu0 %v425
    %460 = vmatprep.subr.mxu0 0.0
    %461 = vmatpush1.msra.mxu0 %v426
    %462 = vmatprep.subr.mxu0 0.0
    %463 = vmatpush1.msra.mxu0 %v427
    %464 = vmatprep.subr.mxu0 0.0
    %465 = vmatpush1.msra.mxu0 %v428
    %466 = vmatprep.subr.mxu0 0.0
    %467 = vmatpush1.msra.mxu0 %v429
    %468 = vmatprep.subr.mxu0 0.0
    %469 = vmatpush1.msra.mxu0 %v430
    %470 = vmatprep.subr.mxu0 0.0
    %471 = vmatpush1.msra.mxu0 0.0
    %472 = vmatprep.subr.mxu0 0.0
    %473 = vmatpush1.msra.mxu0 0.0
    %474 = vmatprep.subr.mxu0 0.0
    %475 = vmatpush1.msra.mxu0 0.0
    %476 = vmatprep.subr.mxu0 0.0
    %477 = vmatpush1.msra.mxu0 0.0
    %478 = vmatprep.subr.mxu0 0.0
    %479 = vmatpush1.msra.mxu0 0.0
    %480 = vmatprep.subr.mxu0 0.0
    %481 = vmatpush1.msra.mxu0 0.0
    %482 = vmatprep.subr.mxu0 0.0
    %483 = vmatpush1.msra.mxu0 0.0
    %484 = vmatprep.subr.mxu0 0.0
    %485 = vmatpush1.msra.mxu0 0.0
    %486 = vmatprep.subr.mxu0 0.0
    %487 = vmatpush1.msra.mxu0 0.0
    %488 = vmatprep.subr.mxu0 0.0
    %489 = vmatpush1.msra.mxu0 0.0
    %490 = vmatprep.subr.mxu0 0.0
    %491 = vmatpush1.msra.mxu0 0.0
    %492 = vmatprep.subr.mxu0 0.0
    %493 = vmatpush1.msra.mxu0 0.0
    %494 = vmatprep.subr.mxu0 0.0
    %495 = vmatpush1.msra.mxu0 0.0
    %496 = vmatprep.subr.mxu0 0.0
    %497 = vmatpush1.msra.mxu0 0.0
    %498 = vmatprep.subr.mxu0 0.0
    %499 = vmatpush1.msra.mxu0 0.0
    %500 = vmatprep.subr.mxu0 0.0
    %501 = vmatpush1.msra.mxu0 0.0
    %502 = vmatprep.mubr.f32.mxu0 0.0
    %503 = vmatmul.mubr.f32.gmra.mrb[0].mxu0 %v414
    %v504 = vpop.f32.mrb[0].mxu0
    %v505 = vadd.f32 %v436, %v504
    %v506 = vpop.f32.mrb[0].mxu0
    %507 = vdwg.mxu0
    %v508 = vld [vmem:[%s7] sm:$0xff]
    %v509 = vld [vmem:[%s7 + $0x8] sm:$0xff]
    %v510 = vld [vmem:[%s7 + $0x10] sm:$0xff]
    %v511 = vld [vmem:[%s7 + $0x18] sm:$0xff]
    %v512 = vld [vmem:[%s7 + $0x20] sm:$0xff]
    %v513 = vld [vmem:[%s7 + $0x28] sm:$0xff]
    %v514 = vld [vmem:[%s7 + $0x30] sm:$0xff]
    %v515 = vld [vmem:[%s7 + $0x38] sm:$0xff]
    %v516 = vld [vmem:[%s7 + $0x40] sm:$0xff]
    %v517 = vld [vmem:[%s7 + $0x48] sm:$0xff]
    %v518 = vld [vmem:[%s7 + $0x50] sm:$0xff]
    %v519 = vld [vmem:[%s7 + $0x58] sm:$0xff]
    %v520 = vld [vmem:[%s7 + $0x60] sm:$0xff]
    %v521 = vld [vmem:[%s7 + $0x68] sm:$0xff]
    %v522 = vld [vmem:[%s7 + $0x70] sm:$0xff]
    %v523 = vld [vmem:[%s7 + $0x78] sm:$0xff]
    %v524 = vld [vmem:[#allocation6] sm:$0x1]
    %v526 = vlaneseq
    %v527 = vshrl.u32 %v526, 7
    %v528 = vsub.s32 0, %v527
    %v529 = vrot.slane %v524, %v528
    %531 = vmatprep.subr.mxu0 0.0
    %532 = vmatpush1.msra.mxu0 %v508
    %533 = vmatprep.subr.mxu0 0.0
    %534 = vmatpush1.msra.mxu0 %v509
    %535 = vmatprep.subr.mxu0 0.0
    %536 = vmatpush1.msra.mxu0 %v510
    %537 = vmatprep.subr.mxu0 0.0
    %538 = vmatpush1.msra.mxu0 %v511
    %539 = vmatprep.subr.mxu0 0.0
    %540 = vmatpush1.msra.mxu0 %v512
    %541 = vmatprep.subr.mxu0 0.0
    %542 = vmatpush1.msra.mxu0 %v513
    %543 = vmatprep.subr.mxu0 0.0
    %544 = vmatpush1.msra.mxu0 %v514
    %545 = vmatprep.subr.mxu0 0.0
    %546 = vmatpush1.msra.mxu0 %v515
    %547 = vmatprep.subr.mxu0 0.0
    %548 = vmatpush1.msra.mxu0 %v516
    %549 = vmatprep.subr.mxu0 0.0
    %550 = vmatpush1.msra.mxu0 %v517
    %551 = vmatprep.subr.mxu0 0.0
    %552 = vmatpush1.msra.mxu0 %v518
    %553 = vmatprep.subr.mxu0 0.0
    %554 = vmatpush1.msra.mxu0 %v519
    %555 = vmatprep.subr.mxu0 0.0
    %556 = vmatpush1.msra.mxu0 %v520
    %557 = vmatprep.subr.mxu0 0.0
    %558 = vmatpush1.msra.mxu0 %v521
    %559 = vmatprep.subr.mxu0 0.0
    %560 = vmatpush1.msra.mxu0 %v522
    %561 = vmatprep.subr.mxu0 0.0
    %562 = vmatpush1.msra.mxu0 %v523
    %563 = vmatprep.subr.mxu0 0.0
    %564 = vmatpush1.msra.mxu0 0.0
    %565 = vmatprep.subr.mxu0 0.0
    %566 = vmatpush1.msra.mxu0 0.0
    %567 = vmatprep.subr.mxu0 0.0
    %568 = vmatpush1.msra.mxu0 0.0
    %569 = vmatprep.subr.mxu0 0.0
    %570 = vmatpush1.msra.mxu0 0.0
    %571 = vmatprep.subr.mxu0 0.0
    %572 = vmatpush1.msra.mxu0 0.0
    %573 = vmatprep.subr.mxu0 0.0
    %574 = vmatpush1.msra.mxu0 0.0
    %575 = vmatprep.subr.mxu0 0.0
    %576 = vmatpush1.msra.mxu0 0.0
    %577 = vmatprep.subr.mxu0 0.0
    %578 = vmatpush1.msra.mxu0 0.0
    %579 = vmatprep.subr.mxu0 0.0
    %580 = vmatpush1.msra.mxu0 0.0
    %581 = vmatprep.subr.mxu0 0.0
    %582 = vmatpush1.msra.mxu0 0.0
    %583 = vmatprep.subr.mxu0 0.0
    %584 = vmatpush1.msra.mxu0 0.0
    %585 = vmatprep.subr.mxu0 0.0
    %586 = vmatpush1.msra.mxu0 0.0
    %587 = vmatprep.subr.mxu0 0.0
    %588 = vmatpush1.msra.mxu0 0.0
    %589 = vmatprep.subr.mxu0 0.0
    %590 = vmatpush1.msra.mxu0 0.0
    %591 = vmatprep.subr.mxu0 0.0
    %592 = vmatpush1.msra.mxu0 0.0
    %593 = vmatprep.subr.mxu0 0.0
    %594 = vmatpush1.msra.mxu0 0.0
    %595 = vmatprep.mubr.f32.mxu0 0.0
    %596 = vmatmul.mubr.f32.gmra.mrb[0].mxu0 %v414
    %v597 = vpop.f32.mrb[0].mxu0
    %v598 = vadd.f32 %v529, %v597
    %v599 = vpop.f32.mrb[0].mxu0
    %600 = vdwg.mxu0
    %v601 = vsub.f32 %v183, %v505
    %v602 = vsel %vm190, %v601, -inf
    %604 = vrot.lane.b32.xlu0 %v602, 127
    %v605 = vpop.permute.xlu0 %604
    %v607 = vmax.f32 %v601, %v605
    %608 = vrot.lane.b32.xlu0 %v602, 126
    %v609 = vpop.permute.xlu0 %608
    %v611 = vmax.f32 %v607, %v609
    %612 = vrot.lane.b32.xlu0 %v602, 125
    %v613 = vpop.permute.xlu0 %612
    %v615 = vmax.f32 %v611, %v613
    %616 = vrot.lane.b32.xlu0 %v197, 126
    %v617 = vpop.permute.xlu0 %616
    %v619 = vmax.f32 %v202, %v617
    %620 = vrot.lane.b32.xlu0 %v197, 125
    %v621 = vpop.permute.xlu0 %620
    %v623 = vmax.f32 %v619, %v621
    %624 = vrot.lane.b32.xlu0 %v203, 126
    %v625 = vpop.permute.xlu0 %624
    %v627 = vmax.f32 %v208, %v625
    %628 = vrot.lane.b32.xlu0 %v203, 125
    %v629 = vpop.permute.xlu0 %628
    %v631 = vmax.f32 %v627, %v629
    %632 = vrot.lane.b32.xlu0 %v209, 126
    %v633 = vpop.permute.xlu0 %632
    %v635 = vmax.f32 %v214, %v633
    %636 = vrot.lane.b32.xlu0 %v209, 125
    %v637 = vpop.permute.xlu0 %636
    %v639 = vmax.f32 %v635, %v637
    %641 = vrot.lane.b32.xlu0 %v623, 16
    %v642 = vpop.permute.xlu0 %641
    %645 = vrot.lane.b32.xlu0 %v631, 32
    %v646 = vpop.permute.xlu0 %645
    %649 = vrot.lane.b32.xlu0 %v639, 48
    %v650 = vpop.permute.xlu0 %649
    %v652 = vsel %vm190, %v615, %v642
    %v653 = vsel %vm228, %v652, %v646
    %v654 = vsel %vm230, %v653, %v650
    %v655 = vld [vmem:[#allocation7] sm:$0xff]
    %v656 = vld [vmem:[#allocation7 + $0x8] sm:$0xff]
    %v657 = vld [vmem:[#allocation7 + $0x10] sm:$0xff]
    %v658 = vld [vmem:[#allocation7 + $0x18] sm:$0xff]
    %v659 = vld [vmem:[#allocation7 + $0x20] sm:$0xff]
    %v660 = vld [vmem:[#allocation7 + $0x28] sm:$0xff]
    %v661 = vld [vmem:[#allocation7 + $0x30] sm:$0xff]
    %v662 = vld [vmem:[#allocation7 + $0x38] sm:$0xff]
    %v663 = vld [vmem:[#allocation9] sm:$0x1]
    %v665 = vlaneseq
    %v666 = vshrl.u32 %v665, 7
    %v667 = vsub.s32 0, %v666
    %v668 = vrot.slane %v663, %v667
    %v671 = vsel %vm247, %v654, 0
    %673 = vmatprep.subr.mxu0 0.0
    %674 = vmatpush1.msra.mxu0 %v655
    %675 = vmatprep.subr.mxu0 0.0
    %676 = vmatpush1.msra.mxu0 %v656
    %677 = vmatprep.subr.mxu0 0.0
    %678 = vmatpush1.msra.mxu0 %v657
    %679 = vmatprep.subr.mxu0 0.0
    %680 = vmatpush1.msra.mxu0 %v658
    %681 = vmatprep.subr.mxu0 0.0
    %682 = vmatpush1.msra.mxu0 %v659
    %683 = vmatprep.subr.mxu0 0.0
    %684 = vmatpush1.msra.mxu0 %v660
    %685 = vmatprep.subr.mxu0 0.0
    %686 = vmatpush1.msra.mxu0 %v661
    %687 = vmatprep.subr.mxu0 0.0
    %688 = vmatpush1.msra.mxu0 %v662
    %689 = vmatprep.subr.mxu0 0.0
    %690 = vmatpush1.msra.mxu0 0.0
    %691 = vmatprep.subr.mxu0 0.0
    %692 = vmatpush1.msra.mxu0 0.0
    %693 = vmatprep.subr.mxu0 0.0
    %694 = vmatpush1.msra.mxu0 0.0
    %695 = vmatprep.subr.mxu0 0.0
    %696 = vmatpush1.msra.mxu0 0.0
    %697 = vmatprep.subr.mxu0 0.0
    %698 = vmatpush1.msra.mxu0 0.0
    %699 = vmatprep.subr.mxu0 0.0
    %700 = vmatpush1.msra.mxu0 0.0
    %701 = vmatprep.subr.mxu0 0.0
    %702 = vmatpush1.msra.mxu0 0.0
    %703 = vmatprep.subr.mxu0 0.0
    %704 = vmatpush1.msra.mxu0 0.0
    %705 = vmatprep.subr.mxu0 0.0
    %706 = vmatpush1.msra.mxu0 0.0
    %707 = vmatprep.subr.mxu0 0.0
    %708 = vmatpush1.msra.mxu0 0.0
    %709 = vmatprep.subr.mxu0 0.0
    %710 = vmatpush1.msra.mxu0 0.0
    %711 = vmatprep.subr.mxu0 0.0
    %712 = vmatpush1.msra.mxu0 0.0
    %713 = vmatprep.subr.mxu0 0.0
    %714 = vmatpush1.msra.mxu0 0.0
    %715 = vmatprep.subr.mxu0 0.0
    %716 = vmatpush1.msra.mxu0 0.0
    %717 = vmatprep.subr.mxu0 0.0
    %718 = vmatpush1.msra.mxu0 0.0
    %719 = vmatprep.subr.mxu0 0.0
    %720 = vmatpush1.msra.mxu0 0.0
    %721 = vmatprep.subr.mxu0 0.0
    %722 = vmatpush1.msra.mxu0 0.0
    %723 = vmatprep.subr.mxu0 0.0
    %724 = vmatpush1.msra.mxu0 0.0
    %725 = vmatprep.subr.mxu0 0.0
    %726 = vmatpush1.msra.mxu0 0.0
    %727 = vmatprep.subr.mxu0 0.0
    %728 = vmatpush1.msra.mxu0 0.0
    %729 = vmatprep.subr.mxu0 0.0
    %730 = vmatpush1.msra.mxu0 0.0
    %731 = vmatprep.subr.mxu0 0.0
    %732 = vmatpush1.msra.mxu0 0.0
    %733 = vmatprep.subr.mxu0 0.0
    %734 = vmatpush1.msra.mxu0 0.0
    %735 = vmatprep.subr.mxu0 0.0
    %736 = vmatpush1.msra.mxu0 0.0
    %737 = vmatprep.mubr.f32.mxu0 0.0
    %738 = vmatmul.mubr.f32.gmra.mrb[0].mxu0 %v671
    %v739 = vpop.f32.mrb[0].mxu0
    %v740 = vadd.f32 %v668, %v739
    %v741 = vpop.f32.mrb[0].mxu0
    %742 = vdwg.mxu0
    %v743 = vld [vmem:[%s11] sm:$0xff]
    %v744 = vld [vmem:[%s11 + $0x8] sm:$0xff]
    %v745 = vld [vmem:[%s11 + $0x10] sm:$0xff]
    %v746 = vld [vmem:[%s11 + $0x18] sm:$0xff]
    %v747 = vld [vmem:[%s11 + $0x20] sm:$0xff]
    %v748 = vld [vmem:[%s11 + $0x28] sm:$0xff]
    %v749 = vld [vmem:[%s11 + $0x30] sm:$0xff]
    %v750 = vld [vmem:[%s11 + $0x38] sm:$0xff]
    %v751 = vld [vmem:[%s11 + $0x40] sm:$0xff]
    %v752 = vld [vmem:[%s11 + $0x48] sm:$0xff]
    %v753 = vld [vmem:[%s11 + $0x50] sm:$0xff]
    %v754 = vld [vmem:[%s11 + $0x58] sm:$0xff]
    %v755 = vld [vmem:[%s11 + $0x60] sm:$0xff]
    %v756 = vld [vmem:[%s11 + $0x68] sm:$0xff]
    %v757 = vld [vmem:[%s11 + $0x70] sm:$0xff]
    %v758 = vld [vmem:[%s11 + $0x78] sm:$0xff]
    %v759 = vld [vmem:[%s12] sm:$0x1]
    %v761 = vlaneseq
    %v762 = vshrl.u32 %v761, 7
    %v763 = vsub.s32 0, %v762
    %v764 = vrot.slane %v759, %v763
    %766 = vmatprep.subr.mxu0 0.0
    %767 = vmatpush1.msra.mxu0 %v743
    %768 = vmatprep.subr.mxu0 0.0
    %769 = vmatpush1.msra.mxu0 %v744
    %770 = vmatprep.subr.mxu0 0.0
    %771 = vmatpush1.msra.mxu0 %v745
    %772 = vmatprep.subr.mxu0 0.0
    %773 = vmatpush1.msra.mxu0 %v746
    %774 = vmatprep.subr.mxu0 0.0
    %775 = vmatpush1.msra.mxu0 %v747
    %776 = vmatprep.subr.mxu0 0.0
    %777 = vmatpush1.msra.mxu0 %v748
    %778 = vmatprep.subr.mxu0 0.0
    %779 = vmatpush1.msra.mxu0 %v749
    %780 = vmatprep.subr.mxu0 0.0
    %781 = vmatpush1.msra.mxu0 %v750
    %782 = vmatprep.subr.mxu0 0.0
    %783 = vmatpush1.msra.mxu0 %v751
    %784 = vmatprep.subr.mxu0 0.0
    %785 = vmatpush1.msra.mxu0 %v752
    %786 = vmatprep.subr.mxu0 0.0
    %787 = vmatpush1.msra.mxu0 %v753
    %788 = vmatprep.subr.mxu0 0.0
    %789 = vmatpush1.msra.mxu0 %v754
    %790 = vmatprep.subr.mxu0 0.0
    %791 = vmatpush1.msra.mxu0 %v755
    %792 = vmatprep.subr.mxu0 0.0
    %793 = vmatpush1.msra.mxu0 %v756
    %794 = vmatprep.subr.mxu0 0.0
    %795 = vmatpush1.msra.mxu0 %v757
    %796 = vmatprep.subr.mxu0 0.0
    %797 = vmatpush1.msra.mxu0 %v758
    %798 = vmatprep.subr.mxu0 0.0
    %799 = vmatpush1.msra.mxu0 0.0
    %800 = vmatprep.subr.mxu0 0.0
    %801 = vmatpush1.msra.mxu0 0.0
    %802 = vmatprep.subr.mxu0 0.0
    %803 = vmatpush1.msra.mxu0 0.0
    %804 = vmatprep.subr.mxu0 0.0
    %805 = vmatpush1.msra.mxu0 0.0
    %806 = vmatprep.subr.mxu0 0.0
    %807 = vmatpush1.msra.mxu0 0.0
    %808 = vmatprep.subr.mxu0 0.0
    %809 = vmatpush1.msra.mxu0 0.0
    %810 = vmatprep.subr.mxu0 0.0
    %811 = vmatpush1.msra.mxu0 0.0
    %812 = vmatprep.subr.mxu0 0.0
    %813 = vmatpush1.msra.mxu0 0.0
    %814 = vmatprep.subr.mxu0 0.0
    %815 = vmatpush1.msra.mxu0 0.0
    %816 = vmatprep.subr.mxu0 0.0
    %817 = vmatpush1.msra.mxu0 0.0
    %818 = vmatprep.subr.mxu0 0.0
    %819 = vmatpush1.msra.mxu0 0.0
    %820 = vmatprep.subr.mxu0 0.0
    %821 = vmatpush1.msra.mxu0 0.0
    %822 = vmatprep.subr.mxu0 0.0
    %823 = vmatpush1.msra.mxu0 0.0
    %824 = vmatprep.subr.mxu0 0.0
    %825 = vmatpush1.msra.mxu0 0.0
    %826 = vmatprep.subr.mxu0 0.0
    %827 = vmatpush1.msra.mxu0 0.0
    %828 = vmatprep.subr.mxu0 0.0
    %829 = vmatpush1.msra.mxu0 0.0
    %830 = vmatprep.mubr.f32.mxu0 0.0
    %831 = vmatmul.mubr.f32.gmra.mrb[0].mxu0 %v740
    %v832 = vpop.f32.mrb[0].mxu0
    %v833 = vadd.f32 %v764, %v832
    %v834 = vpop.f32.mrb[0].mxu0
    %835 = vdwg.mxu0
    %v836 = vmax.f32 %v833, 0.0
    %v837 = vld [vmem:[%s13] sm:$0xff]
    %v838 = vld [vmem:[%s13 + $0x8] sm:$0xff]
    %v839 = vld [vmem:[%s13 + $0x10] sm:$0xff]
    %v840 = vld [vmem:[%s13 + $0x18] sm:$0xff]
    %v841 = vld [vmem:[%s13 + $0x20] sm:$0xff]
    %v842 = vld [vmem:[%s13 + $0x28] sm:$0xff]
    %v843 = vld [vmem:[%s13 + $0x30] sm:$0xff]
    %v844 = vld [vmem:[%s13 + $0x38] sm:$0xff]
    %v845 = vld [vmem:[%s13 + $0x40] sm:$0xff]
    %v846 = vld [vmem:[%s13 + $0x48] sm:$0xff]
    %v847 = vld [vmem:[%s13 + $0x50] sm:$0xff]
    %v848 = vld [vmem:[%s13 + $0x58] sm:$0xff]
    %v849 = vld [vmem:[%s13 + $0x60] sm:$0xff]
    %v850 = vld [vmem:[%s13 + $0x68] sm:$0xff]
    %v851 = vld [vmem:[%s13 + $0x70] sm:$0xff]
    %v852 = vld [vmem:[%s13 + $0x78] sm:$0xff]
    %v853 = vld [vmem:[%s14] sm:$0x1]
    %v855 = vlaneseq
    %v856 = vshrl.u32 %v855, 7
    %v857 = vsub.s32 0, %v856
    %v858 = vrot.slane %v853, %v857
    %860 = vmatprep.subr.mxu0 0.0
    %861 = vmatpush1.msra.mxu0 %v837
    %862 = vmatprep.subr.mxu0 0.0
    %863 = vmatpush1.msra.mxu0 %v838
    %864 = vmatprep.subr.mxu0 0.0
    %865 = vmatpush1.msra.mxu0 %v839
    %866 = vmatprep.subr.mxu0 0.0
    %867 = vmatpush1.msra.mxu0 %v840
    %868 = vmatprep.subr.mxu0 0.0
    %869 = vmatpush1.msra.mxu0 %v841
    %870 = vmatprep.subr.mxu0 0.0
    %871 = vmatpush1.msra.mxu0 %v842
    %872 = vmatprep.subr.mxu0 0.0
    %873 = vmatpush1.msra.mxu0 %v843
    %874 = vmatprep.subr.mxu0 0.0
    %875 = vmatpush1.msra.mxu0 %v844
    %876 = vmatprep.subr.mxu0 0.0
    %877 = vmatpush1.msra.mxu0 %v845
    %878 = vmatprep.subr.mxu0 0.0
    %879 = vmatpush1.msra.mxu0 %v846
    %880 = vmatprep.subr.mxu0 0.0
    %881 = vmatpush1.msra.mxu0 %v847
    %882 = vmatprep.subr.mxu0 0.0
    %883 = vmatpush1.msra.mxu0 %v848
    %884 = vmatprep.subr.mxu0 0.0
    %885 = vmatpush1.msra.mxu0 %v849
    %886 = vmatprep.subr.mxu0 0.0
    %887 = vmatpush1.msra.mxu0 %v850
    %888 = vmatprep.subr.mxu0 0.0
    %889 = vmatpush1.msra.mxu0 %v851
    %890 = vmatprep.subr.mxu0 0.0
    %891 = vmatpush1.msra.mxu0 %v852
    %892 = vmatprep.subr.mxu0 0.0
    %893 = vmatpush1.msra.mxu0 0.0
    %894 = vmatprep.subr.mxu0 0.0
    %895 = vmatpush1.msra.mxu0 0.0
    %896 = vmatprep.subr.mxu0 0.0
    %897 = vmatpush1.msra.mxu0 0.0
    %898 = vmatprep.subr.mxu0 0.0
    %899 = vmatpush1.msra.mxu0 0.0
    %900 = vmatprep.subr.mxu0 0.0
    %901 = vmatpush1.msra.mxu0 0.0
    %902 = vmatprep.subr.mxu0 0.0
    %903 = vmatpush1.msra.mxu0 0.0
    %904 = vmatprep.subr.mxu0 0.0
    %905 = vmatpush1.msra.mxu0 0.0
    %906 = vmatprep.subr.mxu0 0.0
    %907 = vmatpush1.msra.mxu0 0.0
    %908 = vmatprep.subr.mxu0 0.0
    %909 = vmatpush1.msra.mxu0 0.0
    %910 = vmatprep.subr.mxu0 0.0
    %911 = vmatpush1.msra.mxu0 0.0
    %912 = vmatprep.subr.mxu0 0.0
    %913 = vmatpush1.msra.mxu0 0.0
    %914 = vmatprep.subr.mxu0 0.0
    %915 = vmatpush1.msra.mxu0 0.0
    %916 = vmatprep.subr.mxu0 0.0
    %917 = vmatpush1.msra.mxu0 0.0
    %918 = vmatprep.subr.mxu0 0.0
    %919 = vmatpush1.msra.mxu0 0.0
    %920 = vmatprep.subr.mxu0 0.0
    %921 = vmatpush1.msra.mxu0 0.0
    %922 = vmatprep.subr.mxu0 0.0
    %923 = vmatpush1.msra.mxu0 0.0
    %924 = vmatprep.mubr.f32.mxu0 0.0
    %925 = vmatmul.mubr.f32.gmra.mrb[0].mxu0 %v836
    %v926 = vpop.f32.mrb[0].mxu0
    %v927 = vadd.f32 %v858, %v926
    %v928 = vpop.f32.mrb[0].mxu0
    %929 = vdwg.mxu0
    %v930 = vld [vmem:[%s15] sm:$0xff]
    %v931 = vld [vmem:[%s15 + $0x8] sm:$0xff]
    %v932 = vld [vmem:[%s15 + $0x10] sm:$0xff]
    %v933 = vld [vmem:[%s15 + $0x18] sm:$0xff]
    %v934 = vld [vmem:[%s15 + $0x20] sm:$0xff]
    %v935 = vld [vmem:[%s15 + $0x28] sm:$0xff]
    %v936 = vld [vmem:[%s15 + $0x30] sm:$0xff]
    %v937 = vld [vmem:[%s15 + $0x38] sm:$0xff]
    %v938 = vld [vmem:[%s15 + $0x40] sm:$0xff]
    %v939 = vld [vmem:[%s15 + $0x48] sm:$0xff]
    %v940 = vld [vmem:[%s15 + $0x50] sm:$0xff]
    %v941 = vld [vmem:[%s15 + $0x58] sm:$0xff]
    %v942 = vld [vmem:[%s15 + $0x60] sm:$0xff]
    %v943 = vld [vmem:[%s15 + $0x68] sm:$0xff]
    %v944 = vld [vmem:[%s15 + $0x70] sm:$0xff]
    %v945 = vld [vmem:[%s15 + $0x78] sm:$0xff]
    %946 = vmatprep.subr.mxu0 0.0
    %947 = vmatpush1.msra.mxu0 %v930
    %948 = vmatprep.subr.mxu0 0.0
    %949 = vmatpush1.msra.mxu0 %v931
    %950 = vmatprep.subr.mxu0 0.0
    %951 = vmatpush1.msra.mxu0 %v932
    %952 = vmatprep.subr.mxu0 0.0
    %953 = vmatpush1.msra.mxu0 %v933
    %954 = vmatprep.subr.mxu0 0.0
    %955 = vmatpush1.msra.mxu0 %v934
    %956 = vmatprep.subr.mxu0 0.0
    %957 = vmatpush1.msra.mxu0 %v935
    %958 = vmatprep.subr.mxu0 0.0
    %959 = vmatpush1.msra.mxu0 %v936
    %960 = vmatprep.subr.mxu0 0.0
    %961 = vmatpush1.msra.mxu0 %v937
    %962 = vmatprep.subr.mxu0 0.0
    %963 = vmatpush1.msra.mxu0 %v938
    %964 = vmatprep.subr.mxu0 0.0
    %965 = vmatpush1.msra.mxu0 %v939
    %966 = vmatprep.subr.mxu0 0.0
    %967 = vmatpush1.msra.mxu0 %v940
    %968 = vmatprep.subr.mxu0 0.0
    %969 = vmatpush1.msra.mxu0 %v941
    %970 = vmatprep.subr.mxu0 0.0
    %971 = vmatpush1.msra.mxu0 %v942
    %972 = vmatprep.subr.mxu0 0.0
    %973 = vmatpush1.msra.mxu0 %v943
    %974 = vmatprep.subr.mxu0 0.0
    %975 = vmatpush1.msra.mxu0 %v944
    %976 = vmatprep.subr.mxu0 0.0
    %977 = vmatpush1.msra.mxu0 %v945
    %978 = vmatprep.subr.mxu0 0.0
    %979 = vmatpush1.msra.mxu0 0.0
    %980 = vmatprep.subr.mxu0 0.0
    %981 = vmatpush1.msra.mxu0 0.0
    %982 = vmatprep.subr.mxu0 0.0
    %983 = vmatpush1.msra.mxu0 0.0
    %984 = vmatprep.subr.mxu0 0.0
    %985 = vmatpush1.msra.mxu0 0.0
    %986 = vmatprep.subr.mxu0 0.0
    %987 = vmatpush1.msra.mxu0 0.0
    %988 = vmatprep.subr.mxu0 0.0
    %989 = vmatpush1.msra.mxu0 0.0
    %990 = vmatprep.subr.mxu0 0.0
    %991 = vmatpush1.msra.mxu0 0.0
    %992 = vmatprep.subr.mxu0 0.0
    %993 = vmatpush1.msra.mxu0 0.0
    %994 = vmatprep.subr.mxu0 0.0
    %995 = vmatpush1.msra.mxu0 0.0
    %996 = vmatprep.subr.mxu0 0.0
    %997 = vmatpush1.msra.mxu0 0.0
    %998 = vmatprep.subr.mxu0 0.0
    %999 = vmatpush1.msra.mxu0 0.0
    %1000 = vmatprep.subr.mxu0 0.0
    %1001 = vmatpush1.msra.mxu0 0.0
    %1002 = vmatprep.subr.mxu0 0.0
    %1003 = vmatpush1.msra.mxu0 0.0
    %1004 = vmatprep.subr.mxu0 0.0
    %1005 = vmatpush1.msra.mxu0 0.0
    %1006 = vmatprep.subr.mxu0 0.0
    %1007 = vmatpush1.msra.mxu0 0.0
    %1008 = vmatprep.subr.mxu0 0.0
    %1009 = vmatpush1.msra.mxu0 0.0
    %1010 = vmatprep.mubr.f32.mxu0 0.0
    %1011 = vmatmul.mubr.f32.gmra.mrb[0].mxu0 %v836
    %v1012 = vpop.f32.mrb[0].mxu0
    %v1013 = vadd.f32 0.0, %v1012
    %v1014 = vpop.f32.mrb[0].mxu0
    %1015 = vdwg.mxu0
    %v1016 = vadd.f32 %v598, %v1013
    %v1017 = vld [vmem:[%s16] sm:$0x1]
    %v1019 = vlaneseq
    %v1020 = vshrl.u32 %v1019, 7
    %v1021 = vsub.s32 0, %v1020
    %v1022 = vrot.slane %v1017, %v1021
    %v1024 = vadd.f32 %v1016, %v1022
    %v1025 = vsub.f32 %v601, %v927
    %v1026 = vsel %vm190, %v1025, -inf
    %1028 = vrot.lane.b32.xlu0 %v1026, 127
    %v1029 = vpop.permute.xlu0 %1028
    %v1031 = vmax.f32 %v1025, %v1029
    %1032 = vrot.lane.b32.xlu0 %v1026, 126
    %v1033 = vpop.permute.xlu0 %1032
    %v1035 = vmax.f32 %v1031, %v1033
    %1037 = vrot.lane.b32.xlu0 %v619, 16
    %v1038 = vpop.permute.xlu0 %1037
    %1041 = vrot.lane.b32.xlu0 %v627, 32
    %v1042 = vpop.permute.xlu0 %1041
    %1045 = vrot.lane.b32.xlu0 %v635, 48
    %v1046 = vpop.permute.xlu0 %1045
    %v1048 = vsel %vm190, %v1035, %v1038
    %v1049 = vsel %vm228, %v1048, %v1042
    %v1050 = vsel %vm230, %v1049, %v1046
    %v1051 = vld [vmem:[#allocation10] sm:$0xff]
    %v1052 = vld [vmem:[#allocation10 + $0x8] sm:$0xff]
    %v1053 = vld [vmem:[#allocation10 + $0x10] sm:$0xff]
    %v1054 = vld [vmem:[#allocation10 + $0x18] sm:$0xff]
    %v1055 = vld [vmem:[#allocation10 + $0x20] sm:$0xff]
    %v1056 = vld [vmem:[#allocation10 + $0x28] sm:$0xff]
    %v1057 = vld [vmem:[#allocation10 + $0x30] sm:$0xff]
    %v1058 = vld [vmem:[#allocation10 + $0x38] sm:$0xff]
    %v1059 = vld [vmem:[%s18] sm:$0x1]
    %v1061 = vlaneseq
    %v1062 = vshrl.u32 %v1061, 7
    %v1063 = vsub.s32 0, %v1062
    %v1064 = vrot.slane %v1059, %v1063
    %v1067 = vsel %vm247, %v1050, 0
    %1069 = vmatprep.subr.mxu0 0.0
    %1070 = vmatpush1.msra.mxu0 %v1051
    %1071 = vmatprep.subr.mxu0 0.0
    %1072 = vmatpush1.msra.mxu0 %v1052
    %1073 = vmatprep.subr.mxu0 0.0
    %1074 = vmatpush1.msra.mxu0 %v1053
    %1075 = vmatprep.subr.mxu0 0.0
    %1076 = vmatpush1.msra.mxu0 %v1054
    %1077 = vmatprep.subr.mxu0 0.0
    %1078 = vmatpush1.msra.mxu0 %v1055
    %1079 = vmatprep.subr.mxu0 0.0
    %1080 = vmatpush1.msra.mxu0 %v1056
    %1081 = vmatprep.subr.mxu0 0.0
    %1082 = vmatpush1.msra.mxu0 %v1057
    %1083 = vmatprep.subr.mxu0 0.0
    %1084 = vmatpush1.msra.mxu0 %v1058
    %1085 = vmatprep.subr.mxu0 0.0
    %1086 = vmatpush1.msra.mxu0 0.0
    %1087 = vmatprep.subr.mxu0 0.0
    %1088 = vmatpush1.msra.mxu0 0.0
    %1089 = vmatprep.subr.mxu0 0.0
    %1090 = vmatpush1.msra.mxu0 0.0
    %1091 = vmatprep.subr.mxu0 0.0
    %1092 = vmatpush1.msra.mxu0 0.0
    %1093 = vmatprep.subr.mxu0 0.0
    %1094 = vmatpush1.msra.mxu0 0.0
    %1095 = vmatprep.subr.mxu0 0.0
    %1096 = vmatpush1.msra.mxu0 0.0
    %1097 = vmatprep.subr.mxu0 0.0
    %1098 = vmatpush1.msra.mxu0 0.0
    %1099 = vmatprep.subr.mxu0 0.0
    %1100 = vmatpush1.msra.mxu0 0.0
    %1101 = vmatprep.subr.mxu0 0.0
    %1102 = vmatpush1.msra.mxu0 0.0
    %1103 = vmatprep.subr.mxu0 0.0
    %1104 = vmatpush1.msra.mxu0 0.0
    %1105 = vmatprep.subr.mxu0 0.0
    %1106 = vmatpush1.msra.mxu0 0.0
    %1107 = vmatprep.subr.mxu0 0.0
    %1108 = vmatpush1.msra.mxu0 0.0
    %1109 = vmatprep.subr.mxu0 0.0
    %1110 = vmatpush1.msra.mxu0 0.0
    %1111 = vmatprep.subr.mxu0 0.0
    %1112 = vmatpush1.msra.mxu0 0.0
    %1113 = vmatprep.subr.mxu0 0.0
    %1114 = vmatpush1.msra.mxu0 0.0
    %1115 = vmatprep.subr.mxu0 0.0
    %1116 = vmatpush1.msra.mxu0 0.0
    %1117 = vmatprep.subr.mxu0 0.0
    %1118 = vmatpush1.msra.mxu0 0.0
    %1119 = vmatprep.subr.mxu0 0.0
    %1120 = vmatpush1.msra.mxu0 0.0
    %1121 = vmatprep.subr.mxu0 0.0
    %1122 = vmatpush1.msra.mxu0 0.0
    %1123 = vmatprep.subr.mxu0 0.0
    %1124 = vmatpush1.msra.mxu0 0.0
    %1125 = vmatprep.subr.mxu0 0.0
    %1126 = vmatpush1.msra.mxu0 0.0
    %1127 = vmatprep.subr.mxu0 0.0
    %1128 = vmatpush1.msra.mxu0 0.0
    %1129 = vmatprep.subr.mxu0 0.0
    %1130 = vmatpush1.msra.mxu0 0.0
    %1131 = vmatprep.subr.mxu0 0.0
    %1132 = vmatpush1.msra.mxu0 0.0
    %1133 = vmatprep.mubr.f32.mxu0 0.0
    %1134 = vmatmul.mubr.f32.gmra.mrb[0].mxu0 %v1067
    %v1135 = vpop.f32.mrb[0].mxu0
    %v1136 = vadd.f32 %v1064, %v1135
    %v1137 = vpop.f32.mrb[0].mxu0
    %1138 = vdwg.mxu0
    %v1139 = vld [vmem:[#allocation12] sm:$0xff]
    %v1140 = vld [vmem:[#allocation12 + $0x8] sm:$0xff]
    %v1141 = vld [vmem:[#allocation12 + $0x10] sm:$0xff]
    %v1142 = vld [vmem:[#allocation12 + $0x18] sm:$0xff]
    %v1143 = vld [vmem:[#allocation12 + $0x20] sm:$0xff]
    %v1144 = vld [vmem:[#allocation12 + $0x28] sm:$0xff]
    %v1145 = vld [vmem:[#allocation12 + $0x30] sm:$0xff]
    %v1146 = vld [vmem:[#allocation12 + $0x38] sm:$0xff]
    %v1147 = vld [vmem:[#allocation12 + $0x40] sm:$0xff]
    %v1148 = vld [vmem:[#allocation12 + $0x48] sm:$0xff]
    %v1149 = vld [vmem:[#allocation12 + $0x50] sm:$0xff]
    %v1150 = vld [vmem:[#allocation12 + $0x58] sm:$0xff]
    %v1151 = vld [vmem:[#allocation12 + $0x60] sm:$0xff]
    %v1152 = vld [vmem:[#allocation12 + $0x68] sm:$0xff]
    %v1153 = vld [vmem:[#allocation12 + $0x70] sm:$0xff]
    %v1154 = vld [vmem:[#allocation12 + $0x78] sm:$0xff]
    %v1155 = vld [vmem:[%s20] sm:$0x1]
    %v1157 = vlaneseq
    %v1158 = vshrl.u32 %v1157, 7
    %v1159 = vsub.s32 0, %v1158
    %v1160 = vrot.slane %v1155, %v1159
    %1162 = vmatprep.subr.mxu0 0.0
    %1163 = vmatpush1.msra.mxu0 %v1139
    %1164 = vmatprep.subr.mxu0 0.0
    %1165 = vmatpush1.msra.mxu0 %v1140
    %1166 = vmatprep.subr.mxu0 0.0
    %1167 = vmatpush1.msra.mxu0 %v1141
    %1168 = vmatprep.subr.mxu0 0.0
    %1169 = vmatpush1.msra.mxu0 %v1142
    %1170 = vmatprep.subr.mxu0 0.0
    %1171 = vmatpush1.msra.mxu0 %v1143
    %1172 = vmatprep.subr.mxu0 0.0
    %1173 = vmatpush1.msra.mxu0 %v1144
    %1174 = vmatprep.subr.mxu0 0.0
    %1175 = vmatpush1.msra.mxu0 %v1145
    %1176 = vmatprep.subr.mxu0 0.0
    %1177 = vmatpush1.msra.mxu0 %v1146
    %1178 = vmatprep.subr.mxu0 0.0
    %1179 = vmatpush1.msra.mxu0 %v1147
    %1180 = vmatprep.subr.mxu0 0.0
    %1181 = vmatpush1.msra.mxu0 %v1148
    %1182 = vmatprep.subr.mxu0 0.0
    %1183 = vmatpush1.msra.mxu0 %v1149
    %1184 = vmatprep.subr.mxu0 0.0
    %1185 = vmatpush1.msra.mxu0 %v1150
    %1186 = vmatprep.subr.mxu0 0.0
    %1187 = vmatpush1.msra.mxu0 %v1151
    %1188 = vmatprep.subr.mxu0 0.0
    %1189 = vmatpush1.msra.mxu0 %v1152
    %1190 = vmatprep.subr.mxu0 0.0
    %1191 = vmatpush1.msra.mxu0 %v1153
    %1192 = vmatprep.subr.mxu0 0.0
    %1193 = vmatpush1.msra.mxu0 %v1154
    %1194 = vmatprep.subr.mxu0 0.0
    %1195 = vmatpush1.msra.mxu0 0.0
    %1196 = vmatprep.subr.mxu0 0.0
    %1197 = vmatpush1.msra.mxu0 0.0
    %1198 = vmatprep.subr.mxu0 0.0
    %1199 = vmatpush1.msra.mxu0 0.0
    %1200 = vmatprep.subr.mxu0 0.0
    %1201 = vmatpush1.msra.mxu0 0.0
    %1202 = vmatprep.subr.mxu0 0.0
    %1203 = vmatpush1.msra.mxu0 0.0
    %1204 = vmatprep.subr.mxu0 0.0
    %1205 = vmatpush1.msra.mxu0 0.0
    %1206 = vmatprep.subr.mxu0 0.0
    %1207 = vmatpush1.msra.mxu0 0.0
    %1208 = vmatprep.subr.mxu0 0.0
    %1209 = vmatpush1.msra.mxu0 0.0
    %1210 = vmatprep.subr.mxu0 0.0
    %1211 = vmatpush1.msra.mxu0 0.0
    %1212 = vmatprep.subr.mxu0 0.0
    %1213 = vmatpush1.msra.mxu0 0.0
    %1214 = vmatprep.subr.mxu0 0.0
    %1215 = vmatpush1.msra.mxu0 0.0
    %1216 = vmatprep.subr.mxu0 0.0
    %1217 = vmatpush1.msra.mxu0 0.0
    %1218 = vmatprep.subr.mxu0 0.0
    %1219 = vmatpush1.msra.mxu0 0.0
    %1220 = vmatprep.subr.mxu0 0.0
    %1221 = vmatpush1.msra.mxu0 0.0
    %1222 = vmatprep.subr.mxu0 0.0
    %1223 = vmatpush1.msra.mxu0 0.0
    %1224 = vmatprep.subr.mxu0 0.0
    %1225 = vmatpush1.msra.mxu0 0.0
    %1226 = vmatprep.mubr.f32.mxu0 0.0
    %1227 = vmatmul.mubr.f32.gmra.mrb[0].mxu0 %v1136
    %v1228 = vpop.f32.mrb[0].mxu0
    %v1229 = vadd.f32 %v1160, %v1228
    %v1230 = vpop.f32.mrb[0].mxu0
    %1231 = vdwg.mxu0
    %v1232 = vmax.f32 %v1229, 0.0
    %v1233 = vld [vmem:[#allocation13] sm:$0xff]
    %v1234 = vld [vmem:[#allocation13 + $0x8] sm:$0xff]
    %v1235 = vld [vmem:[#allocation13 + $0x10] sm:$0xff]
    %v1236 = vld [vmem:[#allocation13 + $0x18] sm:$0xff]
    %v1237 = vld [vmem:[#allocation13 + $0x20] sm:$0xff]
    %v1238 = vld [vmem:[#allocation13 + $0x28] sm:$0xff]
    %v1239 = vld [vmem:[#allocation13 + $0x30] sm:$0xff]
    %v1240 = vld [vmem:[#allocation13 + $0x38] sm:$0xff]
    %v1241 = vld [vmem:[#allocation13 + $0x40] sm:$0xff]
    %v1242 = vld [vmem:[#allocation13 + $0x48] sm:$0xff]
    %v1243 = vld [vmem:[#allocation13 + $0x50] sm:$0xff]
    %v1244 = vld [vmem:[#allocation13 + $0x58] sm:$0xff]
    %v1245 = vld [vmem:[#allocation13 + $0x60] sm:$0xff]
    %v1246 = vld [vmem:[#allocation13 + $0x68] sm:$0xff]
    %v1247 = vld [vmem:[#allocation13 + $0x70] sm:$0xff]
    %v1248 = vld [vmem:[#allocation13 + $0x78] sm:$0xff]
    %1249 = vmatprep.subr.mxu0 0.0
    %1250 = vmatpush1.msra.mxu0 %v1233
    %1251 = vmatprep.subr.mxu0 0.0
    %1252 = vmatpush1.msra.mxu0 %v1234
    %1253 = vmatprep.subr.mxu0 0.0
    %1254 = vmatpush1.msra.mxu0 %v1235
    %1255 = vmatprep.subr.mxu0 0.0
    %1256 = vmatpush1.msra.mxu0 %v1236
    %1257 = vmatprep.subr.mxu0 0.0
    %1258 = vmatpush1.msra.mxu0 %v1237
    %1259 = vmatprep.subr.mxu0 0.0
    %1260 = vmatpush1.msra.mxu0 %v1238
    %1261 = vmatprep.subr.mxu0 0.0
    %1262 = vmatpush1.msra.mxu0 %v1239
    %1263 = vmatprep.subr.mxu0 0.0
    %1264 = vmatpush1.msra.mxu0 %v1240
    %1265 = vmatprep.subr.mxu0 0.0
    %1266 = vmatpush1.msra.mxu0 %v1241
    %1267 = vmatprep.subr.mxu0 0.0
    %1268 = vmatpush1.msra.mxu0 %v1242
    %1269 = vmatprep.subr.mxu0 0.0
    %1270 = vmatpush1.msra.mxu0 %v1243
    %1271 = vmatprep.subr.mxu0 0.0
    %1272 = vmatpush1.msra.mxu0 %v1244
    %1273 = vmatprep.subr.mxu0 0.0
    %1274 = vmatpush1.msra.mxu0 %v1245
    %1275 = vmatprep.subr.mxu0 0.0
    %1276 = vmatpush1.msra.mxu0 %v1246
    %1277 = vmatprep.subr.mxu0 0.0
    %1278 = vmatpush1.msra.mxu0 %v1247
    %1279 = vmatprep.subr.mxu0 0.0
    %1280 = vmatpush1.msra.mxu0 %v1248
    %1281 = vmatprep.subr.mxu0 0.0
    %1282 = vmatpush1.msra.mxu0 0.0
    %1283 = vmatprep.subr.mxu0 0.0
    %1284 = vmatpush1.msra.mxu0 0.0
    %1285 = vmatprep.subr.mxu0 0.0
    %1286 = vmatpush1.msra.mxu0 0.0
    %1287 = vmatprep.subr.mxu0 0.0
    %1288 = vmatpush1.msra.mxu0 0.0
    %1289 = vmatprep.subr.mxu0 0.0
    %1290 = vmatpush1.msra.mxu0 0.0
    %1291 = vmatprep.subr.mxu0 0.0
    %1292 = vmatpush1.msra.mxu0 0.0
    %1293 = vmatprep.subr.mxu0 0.0
    %1294 = vmatpush1.msra.mxu0 0.0
    %1295 = vmatprep.subr.mxu0 0.0
    %1296 = vmatpush1.msra.mxu0 0.0
    %1297 = vmatprep.subr.mxu0 0.0
    %1298 = vmatpush1.msra.mxu0 0.0
    %1299 = vmatprep.subr.mxu0 0.0
    %1300 = vmatpush1.msra.mxu0 0.0
    %1301 = vmatprep.subr.mxu0 0.0
    %1302 = vmatpush1.msra.mxu0 0.0
    %1303 = vmatprep.subr.mxu0 0.0
    %1304 = vmatpush1.msra.mxu0 0.0
    %1305 = vmatprep.subr.mxu0 0.0
    %1306 = vmatpush1.msra.mxu0 0.0
    %1307 = vmatprep.subr.mxu0 0.0
    %1308 = vmatpush1.msra.mxu0 0.0
    %1309 = vmatprep.subr.mxu0 0.0
    %1310 = vmatpush1.msra.mxu0 0.0
    %1311 = vmatprep.subr.mxu0 0.0
    %1312 = vmatpush1.msra.mxu0 0.0
    %1313 = vmatprep.mubr.f32.mxu0 0.0
    %1314 = vmatmul.mubr.f32.gmra.mrb[0].mxu0 %v1232
    %v1315 = vpop.f32.mrb[0].mxu0
    %v1316 = vadd.f32 0.0, %v1315
    %v1317 = vpop.f32.mrb[0].mxu0
    %1318 = vdwg.mxu0
    %v1319 = vadd.f32 %v1024, %v1316
    %v1320 = vld [vmem:[%s24] sm:$0x1]
    %v1322 = vlaneseq
    %v1323 = vshrl.u32 %v1322, 7
    %v1324 = vsub.s32 0, %v1323
    %v1325 = vrot.slane %v1320, %v1324
    %v1327 = vadd.f32 %v1319, %v1325
    %1328 = vst [vmem:[%s25] sm:$0xff] %v1327
    // Predicated region
    $region134: #{_forward.1} parent=1 // pred_check
      _
    $region135: #{_forward.1} parent=1 // pred_check_branch
      %1330 = sbr.rel (0) target = $region137
    $region136: #{_forward.1} parent=1 // pred_region
      _
    $region137: #{_forward.1} parent=1 // pred_fallthru
      _
    // Predicated region
    $region138: #{_forward.1} parent=1 // pred_check
      _
    $region139: #{_forward.1} parent=1 // pred_check_branch
      %1332 = sbr.rel (0) target = $region141
    $region140: #{_forward.1} parent=1 // pred_region
      _
    $region141: #{_forward.1} parent=1 // pred_fallthru
      _
    %1333 = vsyncpa [#allocation3], 1
    %1334 = vsyncpa [#allocation5], 1
    %1335 = vsyncpa [#allocation8], 1
    %1336 = vsyncpa [#allocation11], 1
    %1337 = vsyncpa [#allocation14], 1

</llo_original>
